<compile_context>
chip_gen: v7x
topology: tpu7x:2x2x1
jax: 0.10.0
libtpu: 0.0.40
codegen_flags: <defaults>
</compile_context>

<pallas_src>
import functools

import jax
import jax.numpy as jnp
import numpy as np
from jax.experimental import pallas as pl
from jax.experimental.pallas import tpu as pltpu

BETA_MIN = 0.1
BETA_MAX = 20.0

# Per-call VMEM budget target (leaves headroom on v7x's 64 MiB physical VMEM;
# also well above v5e's 16 MiB default scoped limit, so we always pass an
# explicit vmem_limit_bytes).
_VMEM_TARGET_BYTES = 48 << 20
_VMEM_LIMIT_CAP_BYTES = 64 << 20


def _round_up(x, m):
    return ((x + m - 1) // m) * m


def _sublane_multiple(dtype):
    # Rows per packed sublane group: 8 for 32-bit, 16 for bf16, 32 for 8-bit.
    return {4: 8, 2: 16, 1: 32}.get(np.dtype(dtype).itemsize, 8)


def _resident_spec(shape):
    """Constant-index (resident) input spec; single-buffered when supported."""
    try:
        return pl.BlockSpec(shape, lambda i: (0, 0), pipeline_mode=pl.Buffered(1))
    except Exception:  # older jax without pipeline_mode / Buffered(1)
        return pl.BlockSpec(shape, lambda i: (0, 0))


def _vpode_kernel(scal_ref, z_ref, w_ref, wt_ref, y_ref, dz_ref, *,
                  logits_precision):
    # scal_ref: SMEM (2,) = [coef = -0.5*beta_t/dis_temp, inv_temp = 1/dis_temp]
    coef = scal_ref[0]
    inv_temp = scal_ref[1]

    z = z_ref[...]                     # (TB, D)  f32 or bf16
    w = w_ref[...]                     # (D, C)   f32 or bf16 (resident)

    # logits = (z @ W) / dis_temp  (MXU, f32 accumulation)
    logits = jnp.dot(z, w, preferred_element_type=jnp.float32,
                     precision=logits_precision) * inv_temp

    # Numerically stable softmax over classes.  Exact divide: the approx EUP
    # reciprocal injected ~1e-3 relative error into the returned gradient.
    m = jnp.max(logits, axis=-1, keepdims=True)
    e = jnp.exp(logits - m)
    s = jnp.sum(e, axis=-1, keepdims=True)
    p = e / s                                       # (TB, C) f32

    # one-hot built in-kernel from int32 labels (no (B, C) f32 DMA).
    y_ids = y_ref[...]                              # (TB, 1) int32
    onehot = (jax.lax.broadcasted_iota(jnp.int32, p.shape, 1) == y_ids)
    onehot = onehot.astype(jnp.float32)

    # Fold -0.5*beta_t and 1/dis_temp into the small (TB, C) tensor, then chain
    # through the resident, pre-transposed head back to z on the MXU.  g stays
    # f32; W^T (read from HBM in matmul_dtype) is promoted in-kernel so bf16
    # inputs do not degrade the gradient math.
    g = (onehot - p) * coef                         # (TB, C) f32
    dz = jnp.dot(g, wt_ref[...].astype(jnp.float32),
                 preferred_element_type=jnp.float32,
                 precision=jax.lax.Precision.HIGHEST)   # (TB, D) f32
    dz_ref[...] = dz.astype(dz_ref.dtype)


def vpode_prepare_head(w, matmul_dtype=jnp.float32):
    """Cast + transpose the classifier head ONCE.

    Hoisted out of vpode_forward so the per-ODE-step call does not re-emit the
    cast/transpose and re-materialize an extra (D, C) HBM array every step.
    bf16 is recommended on v5e/v6e/v7x alike: the MXU is bf16-native on every
    generation and the kernel is HBM-bound, so halving W/z bytes is a
    near-proportional win (softmax / gradient math stays f32 in-kernel).
    """
    w_in = jnp.asarray(w, dtype=matmul_dtype)
    wt_in = jnp.asarray(w_in.T)        # transposed once, outside the kernel
    return w_in, wt_in


def vpode_forward(t_k, z, ys, head, *, beta_min=BETA_MIN, beta_max=BETA_MAX,
                  dis_temp=1.0, block_b=1024, out_dtype=jnp.float32):
    """Returns (dz_dt,) exactly like VPODE.forward(t_k, (z,)).

    head:     (w, w_T) from vpode_prepare_head (its dtype sets the matmul dtype).
    block_b:  batch tile upper bound.  The actual tile is chosen from a VMEM
              budget:  bytes ~= 2*tb*D*el_in (z dbl-buf) + 2*tb*D*el_out
              (dz dbl-buf) + 2*D*C*el_in (W + W^T, single-buffered) + small.
              Default 1024 targets the mem-bound regime (>=85% of HBM roofline
              vs ~29% at 128-row tiles); sweep 512-2048 per chip.
    out_dtype: set jnp.bfloat16 if the downstream integrator tolerates it —
              the f32 writeback is the largest HBM stream after the z read.
    """
    w_in, wt_in = head
    matmul_dtype = w_in.dtype
    B, D = z.shape
    D2, C = w_in.shape
    assert D2 == D, (D2, D)

    beta_t = beta_min + t_k * (beta_max - beta_min)
    coef = -0.5 * beta_t / dis_temp
    scalars = jnp.asarray([coef, 1.0 / dis_temp], dtype=jnp.float32)

    el_in = np.dtype(matmul_dtype).itemsize
    el_out = np.dtype(out_dtype).itemsize
    sub = _sublane_multiple(matmul_dtype)

    # ---- batch tile selection under an explicit VMEM budget -----------------
    tb = min(block_b, _round_up(B, sub))
    tb = max(sub, _round_up(tb, sub))

    def _tile_bytes(t):
        return (2 * t * D * el_in          # z (double-buffered)
                + 2 * t * D * el_out       # dz (double-buffered)
                + 2 * t * 4                # int32 labels (double-buffered)
                + 2 * D * C * el_in        # W + W^T (resident, single-buffered)
                + 2 * t * C * 4)           # (TB, C) intermediates headroom

    while _tile_bytes(tb) > _VMEM_TARGET_BYTES and tb > sub:
        tb = max(sub, _round_up(tb // 2, sub))

    # Keep >=2 grid steps so the "parallel" batch axis can feed both
    # TensorCores on v7x (and overlap prologue/epilogue DMA elsewhere).
    if _round_up(B, tb) == tb and tb >= 2 * sub:
        tb = max(sub, _round_up(tb // 2, sub))

    b_pad = _round_up(B, tb)
    num_tiles = b_pad // tb

    vmem_limit = int(min(_VMEM_LIMIT_CAP_BYTES,
                         max(32 << 20, int(_tile_bytes(tb) * 1.25))))

    # ---- input staging -------------------------------------------------------
    z_in = z.astype(matmul_dtype)
    y_ids = jnp.asarray(ys, dtype=jnp.int32).reshape(B, 1)
    if b_pad != B:
        z_in = jnp.pad(z_in, ((0, b_pad - B), (0, 0)))
        y_ids = jnp.pad(y_ids, ((0, b_pad - B), (0, 0)))

    # TODO(synk): for mid-sized C that is not a multiple of 128, pad the class
    # dim of W/W^T to 128 lanes (mask pad logits with -inf before softmax) to
    # keep the (TB, C) intermediate lane-dense; left as-is since C is tiny here.

    cost = pl.CostEstimate(
        flops=4 * b_pad * D * C,                       # two (TB,D)x(D,C) matmuls
        transcendentals=b_pad * C,                     # exp
        bytes_accessed=(b_pad * D * el_in              # z in
                        + 2 * D * C * el_in            # W + W^T (resident, once)
                        + b_pad * 4                    # labels
                        + b_pad * D * el_out),         # dz out
    )

    # Full f32 MXU passes for the f32 path (matches the full-f32 torch ref);
    # bf16 inputs use the native bf16 MXU path.
    logits_precision = (jax.lax.Precision.HIGHEST
                        if matmul_dtype == jnp.float32
                        else jax.lax.Precision.DEFAULT)
    kernel = functools.partial(_vpode_kernel, logits_precision=logits_precision)

    dz = pl.pallas_call(
        kernel,
        out_shape=jax.ShapeDtypeStruct((b_pad, D), out_dtype),
        grid_spec=pltpu.PrefetchScalarGridSpec(
            num_scalar_prefetch=0,
            grid=(num_tiles,),
            in_specs=[
                pl.BlockSpec((2,), lambda i: (0,),
                             memory_space=pltpu.MemorySpace.SMEM),   # scalars
                pl.BlockSpec((tb, D), lambda i: (i, 0)),             # z tile
                _resident_spec((D, C)),                              # W (resident)
                _resident_spec((C, D)),                              # W^T (resident)
                pl.BlockSpec((tb, 1), lambda i: (i, 0)),             # int labels
            ],
            out_specs=pl.BlockSpec((tb, D), lambda i: (i, 0)),       # dz tile
        ),
        compiler_params=pltpu.CompilerParams(
            dimension_semantics=("parallel",),
            vmem_limit_bytes=vmem_limit),
        cost_estimate=cost,
    )(scalars, z_in, w_in, wt_in, y_ids)

    return (dz[:B],)


# TODO(synk): ccf.g / generate_images / IDLoss / plotting and the reg_z /
# reg_id / reg_logits branches are external black boxes disabled by the default
# config (all regs == 0, save_path=None); they are not modeled here.


if __name__ == "__main__":
    key = jax.random.PRNGKey(0)
    k_z, k_w, k_y = jax.random.split(key, 3)

    B, D, C = 32, 128, 16          # small batch / latent / n_classes
    dis_temp = 1.0
    t_k = 0.5

    z = jax.random.normal(k_z, (B, D), dtype=jnp.float32)
    w = 0.05 * jax.random.normal(k_w, (D, C), dtype=jnp.float32)
    ys = jax.random.randint(k_y, (B,), 0, C)

    # Reference: same math via jax autograd (mirrors torch.autograd.grad path),
    # full-f32 matmul precision like the PyTorch original.
    beta_t = BETA_MIN + t_k * (BETA_MAX - BETA_MIN)
    y_onehot = jax.nn.one_hot(ys, C, dtype=jnp.float32)

    def energy_sum(zz):
        logits = jnp.dot(zz, w, precision=jax.lax.Precision.HIGHEST) / dis_temp
        logp = jax.nn.log_softmax(logits, axis=-1)
        return jnp.sum(jnp.sum(y_onehot * logp, axis=-1))

    ref = -0.5 * beta_t * jax.grad(energy_sum)(z)

    # f32 path; block_b=16 so the batch grid has 2 tiles at this tiny B.
    head_f32 = vpode_prepare_head(w, jnp.float32)
    (dz_f32,) = vpode_forward(t_k, z, ys, head_f32, dis_temp=dis_temp,
                              block_b=16)
    dz_f32 = jax.block_until_ready(dz_f32)
    np.testing.assert_allclose(np.asarray(dz_f32), np.asarray(ref),
                               rtol=1e-3, atol=1e-4)

    # bf16 inputs (recommended on v5e/v6e/v7x): halves z/W HBM bytes; softmax
    # and the second matmul stay f32 in-kernel, so tolerance only reflects the
    # bf16 rounding of z/W on the logits path.
    head_bf16 = vpode_prepare_head(w, jnp.bfloat16)
    (dz_bf16,) = vpode_forward(t_k, z, ys, head_bf16, dis_temp=dis_temp,
                               block_b=16)
    dz_bf16 = jax.block_until_ready(dz_bf16)
    np.testing.assert_allclose(np.asarray(dz_bf16), np.asarray(ref),
                               rtol=5e-2, atol=5e-3)

    # Default (large block_b) path — exercises the VMEM-budget tile sizing and
    # the >=2-grid-step guarantee.
    (dz_def,) = vpode_forward(t_k, z, ys, head_f32, dis_temp=dis_temp)
    dz_def = jax.block_until_ready(dz_def)
    np.testing.assert_allclose(np.asarray(dz_def), np.asarray(dz_f32),
                               rtol=1e-5, atol=1e-6)

    print("KERNEL_OK")
</pallas_src>

<mosaic_0001>
module attributes {stable_mosaic.version = 11 : i64} {
  func.func @_vpode_kernel(%arg0: i32, %arg1: memref<2xf32, #tpu.memory_space<smem>>, %arg2: memref<16x128xf32, #tpu.memory_space<vmem>>, %arg3: memref<128x16xf32, #tpu.memory_space<vmem>>, %arg4: memref<16x128xf32, #tpu.memory_space<vmem>>, %arg5: memref<16x1xi32, #tpu.memory_space<vmem>>, %arg6: memref<16x128xf32, #tpu.memory_space<vmem>>) attributes {dimension_semantics = [#tpu.dimension_semantics<parallel>], iteration_bounds = array<i64: 2>, scalar_prefetch = 0 : i64, scratch_operands = 0 : i64, tpu.core_type = #tpu.core_type<tc>, window_params = [{transform_indices = @transform_0, window_bounds = array<i64: 2>}, {transform_indices = @transform_1, window_bounds = array<i64: 16, 128>}, {pipeline_mode = #tpu.pipeline_mode<synchronous>, transform_indices = @transform_2, window_bounds = array<i64: 128, 16>}, {pipeline_mode = #tpu.pipeline_mode<synchronous>, transform_indices = @transform_3, window_bounds = array<i64: 16, 128>}, {transform_indices = @transform_4, window_bounds = array<i64: 16, 1>}, {transform_indices = @transform_5, window_bounds = array<i64: 16, 128>}]} {
    %c0 = arith.constant 0 : index
    %0 = memref.load %arg1[%c0] : memref<2xf32, #tpu.memory_space<smem>>
    %c1 = arith.constant 1 : index
    %1 = memref.load %arg1[%c1] : memref<2xf32, #tpu.memory_space<smem>>
    %c0_0 = arith.constant 0 : index
    %c0_1 = arith.constant 0 : index
    %2 = vector.load %arg2[%c0_0, %c0_1] : memref<16x128xf32, #tpu.memory_space<vmem>>, vector<16x128xf32>
    %c0_2 = arith.constant 0 : index
    %c0_3 = arith.constant 0 : index
    %3 = vector.load %arg3[%c0_2, %c0_3] : memref<128x16xf32, #tpu.memory_space<vmem>>, vector<128x16xf32>
    %cst = arith.constant dense<0.000000e+00> : vector<16x16xf32>
    %4 = tpu.matmul %2, %3, %cst {dimension_numbers = #tpu.dot_dimension_numbers<[1], [0], [0], [1], [0, 0, 1, 1], [], []>, precision = #tpu.contract_precision<fp32>} : vector<16x128xf32>, vector<128x16xf32>, vector<16x16xf32> -> vector<16x16xf32>
    %5 = vector.broadcast %1 : f32 to vector<16x16xf32>
    %6 = arith.mulf %4, %5 : vector<16x16xf32>
    %cst_4 = arith.constant dense<0xFF800000> : vector<16xf32>
    %7 = vector.multi_reduction <maximumf>, %6, %cst_4 [1] : vector<16x16xf32> to vector<16xf32>
    %8 = vector.shape_cast %7 : vector<16xf32> to vector<16x1xf32>
    %9 = vector.broadcast %8 : vector<16x1xf32> to vector<16x16xf32>
    %10 = arith.subf %6, %9 : vector<16x16xf32>
    %11 = math.exp %10 : vector<16x16xf32>
    %cst_5 = arith.constant dense<0.000000e+00> : vector<16xf32>
    %12 = vector.multi_reduction <add>, %11, %cst_5 [1] : vector<16x16xf32> to vector<16xf32>
    %13 = vector.shape_cast %12 : vector<16xf32> to vector<16x1xf32>
    %14 = vector.broadcast %13 : vector<16x1xf32> to vector<16x16xf32>
    %15 = arith.divf %11, %14 : vector<16x16xf32>
    %c0_6 = arith.constant 0 : index
    %c0_7 = arith.constant 0 : index
    %16 = vector.load %arg5[%c0_6, %c0_7] : memref<16x1xi32, #tpu.memory_space<vmem>>, vector<16x1xi32>
    %17 = tpu.iota {dimensions = array<i32: 1>} : vector<16x16xi32>
    %18 = vector.broadcast %16 : vector<16x1xi32> to vector<16x16xi32>
    %19 = arith.cmpi eq, %17, %18 : vector<16x16xi32>
    %20 = arith.extui %19 : vector<16x16xi1> to vector<16x16xi32>
    %21 = arith.sitofp %20 : vector<16x16xi32> to vector<16x16xf32>
    %22 = arith.subf %21, %15 : vector<16x16xf32>
    %23 = vector.broadcast %0 : f32 to vector<16x16xf32>
    %24 = arith.mulf %22, %23 : vector<16x16xf32>
    %c0_8 = arith.constant 0 : index
    %c0_9 = arith.constant 0 : index
    %25 = vector.load %arg4[%c0_8, %c0_9] : memref<16x128xf32, #tpu.memory_space<vmem>>, vector<16x128xf32>
    %cst_10 = arith.constant dense<0.000000e+00> : vector<16x128xf32>
    %26 = tpu.matmul %24, %25, %cst_10 {dimension_numbers = #tpu.dot_dimension_numbers<[1], [0], [0], [1], [0, 0, 1, 1], [], []>, precision = #tpu.contract_precision<fp32>} : vector<16x16xf32>, vector<16x128xf32>, vector<16x128xf32> -> vector<16x128xf32>
    %c0_11 = arith.constant 0 : index
    %c0_12 = arith.constant 0 : index
    %27 = vector.load %arg6[%c0_11, %c0_12] : memref<16x128xf32, #tpu.memory_space<vmem>>, vector<16x128xf32>
    tpu.vector_store %arg6[%c0_11, %c0_12], %26 {strides = array<i32>} : memref<16x128xf32, #tpu.memory_space<vmem>>, vector<16x128xf32>,
    return
  }
  func.func @transform_0(%arg0: i32) -> i32 {
    %c0_i32 = arith.constant 0 : i32
    %c0_i32_0 = arith.constant 0 : i32
    return %c0_i32 : i32
  }
  func.func @transform_1(%arg0: i32) -> (i32, i32) {
    %c0_i32 = arith.constant 0 : i32
    %c0_i32_0 = arith.constant 0 : i32
    return %arg0, %c0_i32 : i32, i32
  }
  func.func @transform_2(%arg0: i32) -> (i32, i32) {
    %c0_i32 = arith.constant 0 : i32
    %c0_i32_0 = arith.constant 0 : i32
    %c0_i32_1 = arith.constant 0 : i32
    return %c0_i32, %c0_i32_0 : i32, i32
  }
  func.func @transform_3(%arg0: i32) -> (i32, i32) {
    %c0_i32 = arith.constant 0 : i32
    %c0_i32_0 = arith.constant 0 : i32
    %c0_i32_1 = arith.constant 0 : i32
    return %c0_i32, %c0_i32_0 : i32, i32
  }
  func.func @transform_4(%arg0: i32) -> (i32, i32) {
    %c0_i32 = arith.constant 0 : i32
    %c0_i32_0 = arith.constant 0 : i32
    return %arg0, %c0_i32 : i32, i32
  }
  func.func @transform_5(%arg0: i32) -> (i32, i32) {
    %c0_i32 = arith.constant 0 : i32
    %c0_i32_0 = arith.constant 0 : i32
    return %arg0, %c0_i32 : i32, i32
  }
}

</mosaic_0001>

<llo_original>
// kernel: tpu_custom_call.1
$region0: #{tpu_custom_call.1}
  #allocation0 [shape = 'u32[]', space=smem, size = 0x4, offset = 0x4, fixed_abs, tag = 'smem constant byte address 0x4 - core index']
  #allocation1 [shape = 'u32[144,128]{1,0:T(1,128)}', space=vmem, size = 0x12000, scoped, tag = 'internal scratch']
  %s0 = inlined_call_operand.vmem [shape: f32[2], index: 0, kind: input, shape index: {}]
  %s1 = inlined_call_operand.vmem [shape: f32[32,128], index: 1, kind: input, shape index: {}]
  %s2 = inlined_call_operand.vmem [shape: f32[128,16], index: 2, kind: input, shape index: {}]
  %s3 = inlined_call_operand.vmem [shape: f32[16,128], index: 3, kind: input, shape index: {}]
  %s4 = inlined_call_operand.vmem [shape: s32[32,1], index: 4, kind: input, shape index: {}]
  %s5 = inlined_call_operand.hbm [shape: f32[32,128], index: 5, kind: output, shape index: {}]
  %s6 = sld [smem:[#allocation0]]
  $region57: #{tpu_custom_call.1} parent=0
    _
  %s8 = ssub.s32 1, %s6
  %s9 = scalar_select 0, %s8, %s6
  $region1: #{tpu_custom_call.1} parent=0
    #allocation2 [shape = 'u8[512]{0}', space=smem, size = 0x200, scoped, tag = 'input window, operand 0, single buffered']
    #allocation3 [shape = 's32[2]{0}', space=sflag, size = 0x8, scoped, tag = 'scoped memory for tpu_custom_call.1']
    #allocation4 [shape = 's32[2]{0}', space=sflag, size = 0x8, scoped, tag = 'scoped memory for tpu_custom_call.1']
    #allocation5 [shape = 'u8[16384]{0}', space=vmem, size = 0x4000, scoped, tag = 'output window, operand 0']
    %10 = vsyncpa [#allocation4], 0
    %11 = vsyncpa [#allocation3], 0
    %s12 = scalar_lea.sflag [#allocation3], 1
    %13 = vsyncpa %s12, 0
    loop: start=0, step=1, limit=4
    $region2: #{tpu_custom_call.1} parent=1 // loop_pre_header
      _
    $region3: #{tpu_custom_call.1} parent=1 // loop_header
      %s15 = sphi 0, %s19
      %p16 = scmp.ge.s32.totalorder %s15, 4
      %s23 = sphi 0, %s23
      %s25 = sphi 0, %s23
      %s26 = sphi 0, %s25
      %s40 = sphi 0, %s26
      %s46 = sphi 0, %s48
      %s49 = sphi 0, %s46
      %s50 = sphi 0, %s49
      %s66 = sphi 0, %s50
      %s70 = sphi 0, %s70
      %s72 = sphi 0, %s70
      %s73 = sphi 0, %s72
      %s87 = sphi 0, %s73
      %s91 = sphi 0, %s91
      %s93 = sphi 0, %s91
      %s94 = sphi 0, %s93
      %s108 = sphi 0, %s94
      %s114 = sphi 0, %s116
      %s117 = sphi 0, %s114
      %s118 = sphi 0, %s117
      %s134 = sphi 0, %s118
      %s140 = sphi 0, %s142
      %s143 = sphi 0, %s140
      %s144 = sphi 0, %s143
      %s160 = sphi 0, %s144
    $region4: #{tpu_custom_call.1} parent=1 // loop_header_branch
      %18 = sbr.rel (%p16) target = $region8
    $region5: #{tpu_custom_call.1} parent=1 // loop_body
      %s20 = ssub.s32 %s15, 1
      %s21 = ssub.s32 %s15, 2
      %s22 = sadd.s32 %s15, 1
      %s24 = sadd.s32 %s23, 1
      %p27 = scmp.eq.s32.totalorder %s15, 1
      %p28 = scmp.ne.s32.totalorder %s23, %s25
      %p29 = scmp.eq.s32.totalorder %s15, 0
      %p30 = por %p28, %p29
      %p31 = scmp.ne.s32.totalorder %s23, %s25
      %p32 = scmp.eq.s32.totalorder %s20, 1
      %p33 = por %p31, %p32
      %p34 = scmp.ne.s32.totalorder %s25, %s26
      %p35 = scmp.eq.s32.totalorder %s20, 0
      %p36 = por %p34, %p35
      %p37 = scmp.ne.s32.totalorder %s25, %s26
      %p38 = scmp.eq.s32.totalorder %s21, 1
      %p39 = por %p37, %p38
      %p41 = scmp.ne.s32.totalorder %s26, %s40
      %p42 = scmp.eq.s32.totalorder %s21, 0
      %p43 = por %p41, %p42
      %s44 = ssub.s32 %s15, %s22
      %p45 = scmp.eq.s32.totalorder %s44, 0
      %s47 = sadd.s32 %s46, 1
      %s48 = scalar_select %p45, %s46, %s47
      %p51 = pneg %p45
      %p52 = scmp.eq.s32.totalorder %s15, 1
      %p53 = por %p51, %p52
      %p54 = scmp.ne.s32.totalorder %s46, %s49
      %p55 = scmp.eq.s32.totalorder %s15, 0
      %p56 = por %p54, %p55
      %p57 = scmp.ne.s32.totalorder %s46, %s49
      %p58 = scmp.eq.s32.totalorder %s20, 1
      %p59 = por %p57, %p58
      %p60 = scmp.ne.s32.totalorder %s49, %s50
      %p61 = scmp.eq.s32.totalorder %s20, 0
      %p62 = por %p60, %p61
      %p63 = scmp.ne.s32.totalorder %s49, %s50
      %p64 = scmp.eq.s32.totalorder %s21, 1
      %p65 = por %p63, %p64
      %p67 = scmp.ne.s32.totalorder %s50, %s66
      %p68 = scmp.eq.s32.totalorder %s21, 0
      %p69 = por %p67, %p68
      %s71 = sadd.s32 %s70, 1
      %p74 = scmp.eq.s32.totalorder %s15, 1
      %p75 = scmp.ne.s32.totalorder %s70, %s72
      %p76 = scmp.eq.s32.totalorder %s15, 0
      %p77 = por %p75, %p76
      %p78 = scmp.ne.s32.totalorder %s70, %s72
      %p79 = scmp.eq.s32.totalorder %s20, 1
      %p80 = por %p78, %p79
      %p81 = scmp.ne.s32.totalorder %s72, %s73
      %p82 = scmp.eq.s32.totalorder %s20, 0
      %p83 = por %p81, %p82
      %p84 = scmp.ne.s32.totalorder %s72, %s73
      %p85 = scmp.eq.s32.totalorder %s21, 1
      %p86 = por %p84, %p85
      %p88 = scmp.ne.s32.totalorder %s73, %s87
      %p89 = scmp.eq.s32.totalorder %s21, 0
      %p90 = por %p88, %p89
      %s92 = sadd.s32 %s91, 1
      %p95 = scmp.eq.s32.totalorder %s15, 1
      %p96 = scmp.ne.s32.totalorder %s91, %s93
      %p97 = scmp.eq.s32.totalorder %s15, 0
      %p98 = por %p96, %p97
      %p99 = scmp.ne.s32.totalorder %s91, %s93
      %p100 = scmp.eq.s32.totalorder %s20, 1
      %p101 = por %p99, %p100
      %p102 = scmp.ne.s32.totalorder %s93, %s94
      %p103 = scmp.eq.s32.totalorder %s20, 0
      %p104 = por %p102, %p103
      %p105 = scmp.ne.s32.totalorder %s93, %s94
      %p106 = scmp.eq.s32.totalorder %s21, 1
      %p107 = por %p105, %p106
      %p109 = scmp.ne.s32.totalorder %s94, %s108
      %p110 = scmp.eq.s32.totalorder %s21, 0
      %p111 = por %p109, %p110
      %s112 = ssub.s32 %s15, %s22
      %p113 = scmp.eq.s32.totalorder %s112, 0
      %s115 = sadd.s32 %s114, 1
      %s116 = scalar_select %p113, %s114, %s115
      %p119 = pneg %p113
      %p120 = scmp.eq.s32.totalorder %s15, 1
      %p121 = por %p119, %p120
      %p122 = scmp.ne.s32.totalorder %s114, %s117
      %p123 = scmp.eq.s32.totalorder %s15, 0
      %p124 = por %p122, %p123
      %p125 = scmp.ne.s32.totalorder %s114, %s117
      %p126 = scmp.eq.s32.totalorder %s20, 1
      %p127 = por %p125, %p126
      %p128 = scmp.ne.s32.totalorder %s117, %s118
      %p129 = scmp.eq.s32.totalorder %s20, 0
      %p130 = por %p128, %p129
      %p131 = scmp.ne.s32.totalorder %s117, %s118
      %p132 = scmp.eq.s32.totalorder %s21, 1
      %p133 = por %p131, %p132
      %p135 = scmp.ne.s32.totalorder %s118, %s134
      %p136 = scmp.eq.s32.totalorder %s21, 0
      %p137 = por %p135, %p136
      %s138 = ssub.s32 %s15, %s22
      %p139 = scmp.eq.s32.totalorder %s138, 0
      %s141 = sadd.s32 %s140, 1
      %s142 = scalar_select %p139, %s140, %s141
      %p145 = pneg %p139
      %p146 = scmp.eq.s32.totalorder %s15, 1
      %p147 = por %p145, %p146
      %p148 = scmp.ne.s32.totalorder %s140, %s143
      %p149 = scmp.eq.s32.totalorder %s15, 0
      %p150 = por %p148, %p149
      %p151 = scmp.ne.s32.totalorder %s140, %s143
      %p152 = scmp.eq.s32.totalorder %s20, 1
      %p153 = por %p151, %p152
      %p154 = scmp.ne.s32.totalorder %s143, %s144
      %p155 = scmp.eq.s32.totalorder %s20, 0
      %p156 = por %p154, %p155
      %p157 = scmp.ne.s32.totalorder %s143, %s144
      %p158 = scmp.eq.s32.totalorder %s21, 1
      %p159 = por %p157, %p158
      %p161 = scmp.ne.s32.totalorder %s144, %s160
      %p162 = scmp.eq.s32.totalorder %s21, 0
      %p163 = por %p161, %p162
      %p164 = scmp.le.s32.totalorder 1, %s15
      %p165 = scmp.lt.s32.totalorder %s15, 3
      %p166 = pnand %p164, %p165
      %p167 = pneg %p166
      // Predicated region
      $region9: #{tpu_custom_call.1} parent=5 // pred_check
        _
      $region10: #{tpu_custom_call.1} parent=5 // pred_check_branch
        %169 = sbr.rel (%p166) target = $region12
      $region11: #{tpu_custom_call.1} parent=5 // pred_region
        %s170 = ssub.s32 %s15, 1
        // Predicated region
        $region13: #{tpu_custom_call.1} parent=11 // pred_check
          %p171 = pneg %p36
        $region14: #{tpu_custom_call.1} parent=11 // pred_check_branch
          %173 = sbr.rel (%p171) target = $region16
        $region15: #{tpu_custom_call.1} parent=11 // pred_region
          %s175 = ssub.s32 16, 16
          %176 = vsyncadd [#allocation4], %s175
          %s178 = sshll.u32 %s0, 4
          %s179 = int_to_ptr.vmem [resolvable:$true] %s178
          %181 = dma.vmem_to_smem %s179, 16, [#allocation2], [#allocation4]
        $region16: #{tpu_custom_call.1} parent=11 // pred_fallthru
          _
        // Predicated region
        $region17: #{tpu_custom_call.1} parent=11 // pred_check
          %p182 = pneg %p83
        $region18: #{tpu_custom_call.1} parent=11 // pred_check_branch
          %184 = sbr.rel (%p182) target = $region20
        $region19: #{tpu_custom_call.1} parent=11 // pred_region
          _
        $region20: #{tpu_custom_call.1} parent=11 // pred_fallthru
          _
        // Predicated region
        $region21: #{tpu_custom_call.1} parent=11 // pred_check
          %p185 = pneg %p104
        $region22: #{tpu_custom_call.1} parent=11 // pred_check_branch
          %187 = sbr.rel (%p185) target = $region24
        $region23: #{tpu_custom_call.1} parent=11 // pred_region
          _
        $region24: #{tpu_custom_call.1} parent=11 // pred_fallthru
          _
      $region12: #{tpu_custom_call.1} parent=5 // pred_fallthru
        _
      %p188 = scmp.lt.s32.totalorder %s15, 2
      // Predicated region
      $region25: #{tpu_custom_call.1} parent=5 // pred_check
        %p189 = pneg %p188
      $region26: #{tpu_custom_call.1} parent=5 // pred_check_branch
        %191 = sbr.rel (%p189) target = $region28
      $region27: #{tpu_custom_call.1} parent=5 // pred_region
        // Predicated region
        $region29: #{tpu_custom_call.1} parent=27 // pred_check
          %p192 = pneg %p56
        $region30: #{tpu_custom_call.1} parent=27 // pred_check_branch
          %194 = sbr.rel (%p192) target = $region32
        $region31: #{tpu_custom_call.1} parent=27 // pred_region
          %s195 = smul.u32 2, %s15
          %p196 = scmp.lt.s32.totalorder %s195, 3
          %s197 = scalar_select %p196, %s195, 3
          %s198 = smul.addr %s197, 8
          %s199 = scalar_lea.vmem %s1, %s198
          %s200 = smul.u32 2, %s15
        $region32: #{tpu_custom_call.1} parent=27 // pred_fallthru
          _
        // Predicated region
        $region33: #{tpu_custom_call.1} parent=27 // pred_check
          %p201 = pneg %p124
        $region34: #{tpu_custom_call.1} parent=27 // pred_check_branch
          %203 = sbr.rel (%p201) target = $region36
        $region35: #{tpu_custom_call.1} parent=27 // pred_region
          %s204 = smul.u32 2, %s15
          %p205 = scmp.lt.s32.totalorder %s204, 3
          %s206 = scalar_select %p205, %s204, 3
          %s207 = smul.addr %s206, 8
          %s208 = scalar_lea.vmem %s4, %s207
          %s209 = smul.u32 2, %s15
        $region36: #{tpu_custom_call.1} parent=27 // pred_fallthru
          _
      $region28: #{tpu_custom_call.1} parent=5 // pred_fallthru
        _
      %p210 = scmp.le.s32.totalorder 1, %s15
      %p211 = scmp.lt.s32.totalorder %s15, 3
      %p212 = pnand %p210, %p211
      %p213 = pneg %p212
      // Predicated region
      $region37: #{tpu_custom_call.1} parent=5 // pred_check
        _
      $region38: #{tpu_custom_call.1} parent=5 // pred_check_branch
        %215 = sbr.rel (%p212) target = $region40
      $region39: #{tpu_custom_call.1} parent=5 // pred_region
        %s216 = ssub.s32 %s15, 1
        // Predicated region
        $region41: #{tpu_custom_call.1} parent=39 // pred_check
          %p217 = pneg %p36
        $region42: #{tpu_custom_call.1} parent=39 // pred_check_branch
          %219 = sbr.rel (%p217) target = $region44
        $region43: #{tpu_custom_call.1} parent=39 // pred_region
          %220 = dma.done [#allocation4], 16
        $region44: #{tpu_custom_call.1} parent=39 // pred_fallthru
          _
        %221 = sfence
        %p222 = pneg %p36
        %p223 = pneg %p33
        %s224 = smul.u32 2, %s20
        %p225 = scmp.lt.s32.totalorder %s224, 3
        %s226 = scalar_select %p225, %s224, 3
        %s227 = smul.addr %s226, 8
        %s228 = scalar_lea.vmem %s1, %s227
        %p229 = pneg %p62
        %p230 = pneg %p59
        %p231 = pneg %p83
        %p232 = pneg %p80
        %p233 = pneg %p104
        %p234 = pneg %p101
        %s235 = smul.u32 2, %s20
        %p236 = scmp.lt.s32.totalorder %s235, 3
        %s237 = scalar_select %p236, %s235, 3
        %s238 = smul.addr %s237, 8
        %s239 = scalar_lea.vmem %s4, %s238
        %p240 = pneg %p130
        %p241 = pneg %p127
        %p242 = pneg %p156
        %p243 = pneg %p153
        %s244 = sand.u32 %s143, 1
        %s245 = scalar_lea.sflag [#allocation3], %s244
        %s246 = sand.u32 %s143, 1
        %s247 = smul.addr %s246, 16
        %s248 = scalar_lea.vmem [#allocation5], %s247
        %s249 = smul.u32 2, %s20
        %p250 = scmp.lt.s32.totalorder %s249, 3
        %s251 = scalar_select %p250, %s249, 3
        %s252 = smul.addr %s251, 8
        %s253 = scalar_lea.vmem %s1, %s252
        %s254 = smul.u32 2, %s20
        %s255 = smul.u32 2, %s20
        %p256 = scmp.lt.s32.totalorder %s255, 3
        %s257 = scalar_select %p256, %s255, 3
        %s258 = smul.addr %s257, 8
        %s259 = scalar_lea.vmem %s4, %s258
        %s260 = smul.u32 2, %s20
        %s261 = smul.u32 2, %s20
        %s262 = sld [smem:[#allocation2]]
        %s263 = sld [smem:[#allocation2 + $0x1]]
        %v264 = vld [vmem:[%s253] sm:$0xff]
        %v265 = vld [vmem:[%s253 + $0x8] sm:$0xff]
        %v266 = vld [vmem:[%s2] sm:$0xff]
        %v267 = vld [vmem:[%s2 + $0x8] sm:$0xff]
        %v268 = vld [vmem:[%s2 + $0x10] sm:$0xff]
        %v269 = vld [vmem:[%s2 + $0x18] sm:$0xff]
        %v270 = vld [vmem:[%s2 + $0x20] sm:$0xff]
        %v271 = vld [vmem:[%s2 + $0x28] sm:$0xff]
        %v272 = vld [vmem:[%s2 + $0x30] sm:$0xff]
        %v273 = vld [vmem:[%s2 + $0x38] sm:$0xff]
        %v274 = vld [vmem:[%s2 + $0x40] sm:$0xff]
        %v275 = vld [vmem:[%s2 + $0x48] sm:$0xff]
        %v276 = vld [vmem:[%s2 + $0x50] sm:$0xff]
        %v277 = vld [vmem:[%s2 + $0x58] sm:$0xff]
        %v278 = vld [vmem:[%s2 + $0x60] sm:$0xff]
        %v279 = vld [vmem:[%s2 + $0x68] sm:$0xff]
        %v280 = vld [vmem:[%s2 + $0x70] sm:$0xff]
        %v281 = vld [vmem:[%s2 + $0x78] sm:$0xff]
        %282 = vmatprep.subr.mxu0 0.0
        %v283 = vand.u32 %v266, 4294901760
        %284 = vmatpush1.msra.mxu0 %v283
        %285 = vmatprep.subr.mxu0 0.0
        %v286 = vand.u32 %v267, 4294901760
        %287 = vmatpush1.msra.mxu0 %v286
        %288 = vmatprep.subr.mxu0 0.0
        %v289 = vand.u32 %v268, 4294901760
        %290 = vmatpush1.msra.mxu0 %v289
        %291 = vmatprep.subr.mxu0 0.0
        %v292 = vand.u32 %v269, 4294901760
        %293 = vmatpush1.msra.mxu0 %v292
        %294 = vmatprep.subr.mxu0 0.0
        %v295 = vand.u32 %v270, 4294901760
        %296 = vmatpush1.msra.mxu0 %v295
        %297 = vmatprep.subr.mxu0 0.0
        %v298 = vand.u32 %v271, 4294901760
        %299 = vmatpush1.msra.mxu0 %v298
        %300 = vmatprep.subr.mxu0 0.0
        %v301 = vand.u32 %v272, 4294901760
        %302 = vmatpush1.msra.mxu0 %v301
        %303 = vmatprep.subr.mxu0 0.0
        %v304 = vand.u32 %v273, 4294901760
        %305 = vmatpush1.msra.mxu0 %v304
        %306 = vmatprep.subr.mxu0 0.0
        %v307 = vand.u32 %v274, 4294901760
        %308 = vmatpush1.msra.mxu0 %v307
        %309 = vmatprep.subr.mxu0 0.0
        %v310 = vand.u32 %v275, 4294901760
        %311 = vmatpush1.msra.mxu0 %v310
        %312 = vmatprep.subr.mxu0 0.0
        %v313 = vand.u32 %v276, 4294901760
        %314 = vmatpush1.msra.mxu0 %v313
        %315 = vmatprep.subr.mxu0 0.0
        %v316 = vand.u32 %v277, 4294901760
        %317 = vmatpush1.msra.mxu0 %v316
        %318 = vmatprep.subr.mxu0 0.0
        %v319 = vand.u32 %v278, 4294901760
        %320 = vmatpush1.msra.mxu0 %v319
        %321 = vmatprep.subr.mxu0 0.0
        %v322 = vand.u32 %v279, 4294901760
        %323 = vmatpush1.msra.mxu0 %v322
        %324 = vmatprep.subr.mxu0 0.0
        %v325 = vand.u32 %v280, 4294901760
        %326 = vmatpush1.msra.mxu0 %v325
        %327 = vmatprep.subr.mxu0 0.0
        %v328 = vand.u32 %v281, 4294901760
        %329 = vmatpush1.msra.mxu0 %v328
        %330 = vmatprep.subr.mxu0 0.0
        %331 = vmatpush1.msra.mxu0 0.0
        %332 = vmatprep.subr.mxu0 0.0
        %333 = vmatpush1.msra.mxu0 0.0
        %334 = vmatprep.subr.mxu0 0.0
        %335 = vmatpush1.msra.mxu0 0.0
        %336 = vmatprep.subr.mxu0 0.0
        %337 = vmatpush1.msra.mxu0 0.0
        %338 = vmatprep.subr.mxu0 0.0
        %339 = vmatpush1.msra.mxu0 0.0
        %340 = vmatprep.subr.mxu0 0.0
        %341 = vmatpush1.msra.mxu0 0.0
        %342 = vmatprep.subr.mxu0 0.0
        %343 = vmatpush1.msra.mxu0 0.0
        %344 = vmatprep.subr.mxu0 0.0
        %345 = vmatpush1.msra.mxu0 0.0
        %346 = vmatprep.subr.mxu0 0.0
        %347 = vmatpush1.msra.mxu0 0.0
        %348 = vmatprep.subr.mxu0 0.0
        %349 = vmatpush1.msra.mxu0 0.0
        %350 = vmatprep.subr.mxu0 0.0
        %351 = vmatpush1.msra.mxu0 0.0
        %352 = vmatprep.subr.mxu0 0.0
        %353 = vmatpush1.msra.mxu0 0.0
        %354 = vmatprep.subr.mxu0 0.0
        %355 = vmatpush1.msra.mxu0 0.0
        %356 = vmatprep.subr.mxu0 0.0
        %357 = vmatpush1.msra.mxu0 0.0
        %358 = vmatprep.subr.mxu0 0.0
        %359 = vmatpush1.msra.mxu0 0.0
        %360 = vmatprep.subr.mxu0 0.0
        %361 = vmatpush1.msra.mxu0 0.0
        %362 = vmatprep.mubr.f32.mxu0 0.0
        %v363 = vand.u32 %v264, 4294901760
        %v364 = vsub.f32 %v264, %v363
        %v365 = vand.u32 %v364, 4294901760
        %v366 = vsub.f32 %v364, %v365
        %v367 = vand.u32 %v366, 4294901760
        %368 = vmatmul.mubr.f32.gmra.mrb[0].mxu0 %v367
        %v369 = vpop.f32.mrb[0].mxu0
        %v370 = vadd.f32 0.0, %v369
        %v371 = vpop.f32.mrb[0].mxu0
        %372 = vmatprep.mubr.f32.mxu0 0.0
        %v373 = vand.u32 %v265, 4294901760
        %v374 = vsub.f32 %v265, %v373
        %v375 = vand.u32 %v374, 4294901760
        %v376 = vsub.f32 %v374, %v375
        %v377 = vand.u32 %v376, 4294901760
        %378 = vmatmul.mubr.f32.gmra.mrb[0].mxu0 %v377
        %v379 = vpop.f32.mrb[0].mxu0
        %v380 = vadd.f32 0.0, %v379
        %v381 = vpop.f32.mrb[0].mxu0
        %382 = vdwg.mxu0
        %383 = vmatprep.subr.mxu0 0.0
        %v384 = vand.u32 %v266, 4294901760
        %v385 = vsub.f32 %v266, %v384
        %v386 = vand.u32 %v385, 4294901760
        %v387 = vsub.f32 %v385, %v386
        %v388 = vand.u32 %v387, 4294901760
        %389 = vmatpush1.msra.mxu0 %v388
        %390 = vmatprep.subr.mxu0 0.0
        %v391 = vand.u32 %v267, 4294901760
        %v392 = vsub.f32 %v267, %v391
        %v393 = vand.u32 %v392, 4294901760
        %v394 = vsub.f32 %v392, %v393
        %v395 = vand.u32 %v394, 4294901760
        %396 = vmatpush1.msra.mxu0 %v395
        %397 = vmatprep.subr.mxu0 0.0
        %v398 = vand.u32 %v268, 4294901760
        %v399 = vsub.f32 %v268, %v398
        %v400 = vand.u32 %v399, 4294901760
        %v401 = vsub.f32 %v399, %v400
        %v402 = vand.u32 %v401, 4294901760
        %403 = vmatpush1.msra.mxu0 %v402
        %404 = vmatprep.subr.mxu0 0.0
        %v405 = vand.u32 %v269, 4294901760
        %v406 = vsub.f32 %v269, %v405
        %v407 = vand.u32 %v406, 4294901760
        %v408 = vsub.f32 %v406, %v407
        %v409 = vand.u32 %v408, 4294901760
        %410 = vmatpush1.msra.mxu0 %v409
        %411 = vmatprep.subr.mxu0 0.0
        %v412 = vand.u32 %v270, 4294901760
        %v413 = vsub.f32 %v270, %v412
        %v414 = vand.u32 %v413, 4294901760
        %v415 = vsub.f32 %v413, %v414
        %v416 = vand.u32 %v415, 4294901760
        %417 = vmatpush1.msra.mxu0 %v416
        %418 = vmatprep.subr.mxu0 0.0
        %v419 = vand.u32 %v271, 4294901760
        %v420 = vsub.f32 %v271, %v419
        %v421 = vand.u32 %v420, 4294901760
        %v422 = vsub.f32 %v420, %v421
        %v423 = vand.u32 %v422, 4294901760
        %424 = vmatpush1.msra.mxu0 %v423
        %425 = vmatprep.subr.mxu0 0.0
        %v426 = vand.u32 %v272, 4294901760
        %v427 = vsub.f32 %v272, %v426
        %v428 = vand.u32 %v427, 4294901760
        %v429 = vsub.f32 %v427, %v428
        %v430 = vand.u32 %v429, 4294901760
        %431 = vmatpush1.msra.mxu0 %v430
        %432 = vmatprep.subr.mxu0 0.0
        %v433 = vand.u32 %v273, 4294901760
        %v434 = vsub.f32 %v273, %v433
        %v435 = vand.u32 %v434, 4294901760
        %v436 = vsub.f32 %v434, %v435
        %v437 = vand.u32 %v436, 4294901760
        %438 = vmatpush1.msra.mxu0 %v437
        %439 = vmatprep.subr.mxu0 0.0
        %v440 = vand.u32 %v274, 4294901760
        %v441 = vsub.f32 %v274, %v440
        %v442 = vand.u32 %v441, 4294901760
        %v443 = vsub.f32 %v441, %v442
        %v444 = vand.u32 %v443, 4294901760
        %445 = vmatpush1.msra.mxu0 %v444
        %446 = vmatprep.subr.mxu0 0.0
        %v447 = vand.u32 %v275, 4294901760
        %v448 = vsub.f32 %v275, %v447
        %v449 = vand.u32 %v448, 4294901760
        %v450 = vsub.f32 %v448, %v449
        %v451 = vand.u32 %v450, 4294901760
        %452 = vmatpush1.msra.mxu0 %v451
        %453 = vmatprep.subr.mxu0 0.0
        %v454 = vand.u32 %v276, 4294901760
        %v455 = vsub.f32 %v276, %v454
        %v456 = vand.u32 %v455, 4294901760
        %v457 = vsub.f32 %v455, %v456
        %v458 = vand.u32 %v457, 4294901760
        %459 = vmatpush1.msra.mxu0 %v458
        %460 = vmatprep.subr.mxu0 0.0
        %v461 = vand.u32 %v277, 4294901760
        %v462 = vsub.f32 %v277, %v461
        %v463 = vand.u32 %v462, 4294901760
        %v464 = vsub.f32 %v462, %v463
        %v465 = vand.u32 %v464, 4294901760
        %466 = vmatpush1.msra.mxu0 %v465
        %467 = vmatprep.subr.mxu0 0.0
        %v468 = vand.u32 %v278, 4294901760
        %v469 = vsub.f32 %v278, %v468
        %v470 = vand.u32 %v469, 4294901760
        %v471 = vsub.f32 %v469, %v470
        %v472 = vand.u32 %v471, 4294901760
        %473 = vmatpush1.msra.mxu0 %v472
        %474 = vmatprep.subr.mxu0 0.0
        %v475 = vand.u32 %v279, 4294901760
        %v476 = vsub.f32 %v279, %v475
        %v477 = vand.u32 %v476, 4294901760
        %v478 = vsub.f32 %v476, %v477
        %v479 = vand.u32 %v478, 4294901760
        %480 = vmatpush1.msra.mxu0 %v479
        %481 = vmatprep.subr.mxu0 0.0
        %v482 = vand.u32 %v280, 4294901760
        %v483 = vsub.f32 %v280, %v482
        %v484 = vand.u32 %v483, 4294901760
        %v485 = vsub.f32 %v483, %v484
        %v486 = vand.u32 %v485, 4294901760
        %487 = vmatpush1.msra.mxu0 %v486
        %488 = vmatprep.subr.mxu0 0.0
        %v489 = vand.u32 %v281, 4294901760
        %v490 = vsub.f32 %v281, %v489
        %v491 = vand.u32 %v490, 4294901760
        %v492 = vsub.f32 %v490, %v491
        %v493 = vand.u32 %v492, 4294901760
        %494 = vmatpush1.msra.mxu0 %v493
        %495 = vmatprep.subr.mxu0 0.0
        %496 = vmatpush1.msra.mxu0 0.0
        %497 = vmatprep.subr.mxu0 0.0
        %498 = vmatpush1.msra.mxu0 0.0
        %499 = vmatprep.subr.mxu0 0.0
        %500 = vmatpush1.msra.mxu0 0.0
        %501 = vmatprep.subr.mxu0 0.0
        %502 = vmatpush1.msra.mxu0 0.0
        %503 = vmatprep.subr.mxu0 0.0
        %504 = vmatpush1.msra.mxu0 0.0
        %505 = vmatprep.subr.mxu0 0.0
        %506 = vmatpush1.msra.mxu0 0.0
        %507 = vmatprep.subr.mxu0 0.0
        %508 = vmatpush1.msra.mxu0 0.0
        %509 = vmatprep.subr.mxu0 0.0
        %510 = vmatpush1.msra.mxu0 0.0
        %511 = vmatprep.subr.mxu0 0.0
        %512 = vmatpush1.msra.mxu0 0.0
        %513 = vmatprep.subr.mxu0 0.0
        %514 = vmatpush1.msra.mxu0 0.0
        %515 = vmatprep.subr.mxu0 0.0
        %516 = vmatpush1.msra.mxu0 0.0
        %517 = vmatprep.subr.mxu0 0.0
        %518 = vmatpush1.msra.mxu0 0.0
        %519 = vmatprep.subr.mxu0 0.0
        %520 = vmatpush1.msra.mxu0 0.0
        %521 = vmatprep.subr.mxu0 0.0
        %522 = vmatpush1.msra.mxu0 0.0
        %523 = vmatprep.subr.mxu0 0.0
        %524 = vmatpush1.msra.mxu0 0.0
        %525 = vmatprep.subr.mxu0 0.0
        %526 = vmatpush1.msra.mxu0 0.0
        %527 = vmatprep.mubr.f32.mxu0 0.0
        %v528 = vand.u32 %v264, 4294901760
        %529 = vmatmul.mubr.f32.gmra.mrb[0].mxu0 %v528
        %v530 = vpop.f32.mrb[0].mxu0
        %v531 = vadd.f32 %v370, %v530
        %v532 = vpop.f32.mrb[0].mxu0
        %533 = vmatprep.mubr.f32.mxu0 0.0
        %v534 = vand.u32 %v265, 4294901760
        %535 = vmatmul.mubr.f32.gmra.mrb[0].mxu0 %v534
        %v536 = vpop.f32.mrb[0].mxu0
        %v537 = vadd.f32 %v380, %v536
        %v538 = vpop.f32.mrb[0].mxu0
        %539 = vdwg.mxu0
        %540 = vmatprep.subr.mxu0 0.0
        %v541 = vand.u32 %v266, 4294901760
        %v542 = vsub.f32 %v266, %v541
        %543 = vmatpush1.msra.mxu0 %v542
        %544 = vmatprep.subr.mxu0 0.0
        %v545 = vand.u32 %v267, 4294901760
        %v546 = vsub.f32 %v267, %v545
        %547 = vmatpush1.msra.mxu0 %v546
        %548 = vmatprep.subr.mxu0 0.0
        %v549 = vand.u32 %v268, 4294901760
        %v550 = vsub.f32 %v268, %v549
        %551 = vmatpush1.msra.mxu0 %v550
        %552 = vmatprep.subr.mxu0 0.0
        %v553 = vand.u32 %v269, 4294901760
        %v554 = vsub.f32 %v269, %v553
        %555 = vmatpush1.msra.mxu0 %v554
        %556 = vmatprep.subr.mxu0 0.0
        %v557 = vand.u32 %v270, 4294901760
        %v558 = vsub.f32 %v270, %v557
        %559 = vmatpush1.msra.mxu0 %v558
        %560 = vmatprep.subr.mxu0 0.0
        %v561 = vand.u32 %v271, 4294901760
        %v562 = vsub.f32 %v271, %v561
        %563 = vmatpush1.msra.mxu0 %v562
        %564 = vmatprep.subr.mxu0 0.0
        %v565 = vand.u32 %v272, 4294901760
        %v566 = vsub.f32 %v272, %v565
        %567 = vmatpush1.msra.mxu0 %v566
        %568 = vmatprep.subr.mxu0 0.0
        %v569 = vand.u32 %v273, 4294901760
        %v570 = vsub.f32 %v273, %v569
        %571 = vmatpush1.msra.mxu0 %v570
        %572 = vmatprep.subr.mxu0 0.0
        %v573 = vand.u32 %v274, 4294901760
        %v574 = vsub.f32 %v274, %v573
        %575 = vmatpush1.msra.mxu0 %v574
        %576 = vmatprep.subr.mxu0 0.0
        %v577 = vand.u32 %v275, 4294901760
        %v578 = vsub.f32 %v275, %v577
        %579 = vmatpush1.msra.mxu0 %v578
        %580 = vmatprep.subr.mxu0 0.0
        %v581 = vand.u32 %v276, 4294901760
        %v582 = vsub.f32 %v276, %v581
        %583 = vmatpush1.msra.mxu0 %v582
        %584 = vmatprep.subr.mxu0 0.0
        %v585 = vand.u32 %v277, 4294901760
        %v586 = vsub.f32 %v277, %v585
        %587 = vmatpush1.msra.mxu0 %v586
        %588 = vmatprep.subr.mxu0 0.0
        %v589 = vand.u32 %v278, 4294901760
        %v590 = vsub.f32 %v278, %v589
        %591 = vmatpush1.msra.mxu0 %v590
        %592 = vmatprep.subr.mxu0 0.0
        %v593 = vand.u32 %v279, 4294901760
        %v594 = vsub.f32 %v279, %v593
        %595 = vmatpush1.msra.mxu0 %v594
        %596 = vmatprep.subr.mxu0 0.0
        %v597 = vand.u32 %v280, 4294901760
        %v598 = vsub.f32 %v280, %v597
        %599 = vmatpush1.msra.mxu0 %v598
        %600 = vmatprep.subr.mxu0 0.0
        %v601 = vand.u32 %v281, 4294901760
        %v602 = vsub.f32 %v281, %v601
        %603 = vmatpush1.msra.mxu0 %v602
        %604 = vmatprep.subr.mxu0 0.0
        %605 = vmatpush1.msra.mxu0 0.0
        %606 = vmatprep.subr.mxu0 0.0
        %607 = vmatpush1.msra.mxu0 0.0
        %608 = vmatprep.subr.mxu0 0.0
        %609 = vmatpush1.msra.mxu0 0.0
        %610 = vmatprep.subr.mxu0 0.0
        %611 = vmatpush1.msra.mxu0 0.0
        %612 = vmatprep.subr.mxu0 0.0
        %613 = vmatpush1.msra.mxu0 0.0
        %614 = vmatprep.subr.mxu0 0.0
        %615 = vmatpush1.msra.mxu0 0.0
        %616 = vmatprep.subr.mxu0 0.0
        %617 = vmatpush1.msra.mxu0 0.0
        %618 = vmatprep.subr.mxu0 0.0
        %619 = vmatpush1.msra.mxu0 0.0
        %620 = vmatprep.subr.mxu0 0.0
        %621 = vmatpush1.msra.mxu0 0.0
        %622 = vmatprep.subr.mxu0 0.0
        %623 = vmatpush1.msra.mxu0 0.0
        %624 = vmatprep.subr.mxu0 0.0
        %625 = vmatpush1.msra.mxu0 0.0
        %626 = vmatprep.subr.mxu0 0.0
        %627 = vmatpush1.msra.mxu0 0.0
        %628 = vmatprep.subr.mxu0 0.0
        %629 = vmatpush1.msra.mxu0 0.0
        %630 = vmatprep.subr.mxu0 0.0
        %631 = vmatpush1.msra.mxu0 0.0
        %632 = vmatprep.subr.mxu0 0.0
        %633 = vmatpush1.msra.mxu0 0.0
        %634 = vmatprep.subr.mxu0 0.0
        %635 = vmatpush1.msra.mxu0 0.0
        %636 = vmatprep.mubr.f32.mxu0 0.0
        %v637 = vand.u32 %v264, 4294901760
        %v638 = vsub.f32 %v264, %v637
        %639 = vmatmul.mubr.f32.gmra.mrb[0].mxu0 %v638
        %v640 = vpop.f32.mrb[0].mxu0
        %v641 = vadd.f32 %v531, %v640
        %v642 = vpop.f32.mrb[0].mxu0
        %643 = vmatprep.mubr.f32.mxu0 0.0
        %v644 = vand.u32 %v265, 4294901760
        %v645 = vsub.f32 %v265, %v644
        %646 = vmatmul.mubr.f32.gmra.mrb[0].mxu0 %v645
        %v647 = vpop.f32.mrb[0].mxu0
        %v648 = vadd.f32 %v537, %v647
        %v649 = vpop.f32.mrb[0].mxu0
        %650 = vdwg.mxu0
        %651 = vmatprep.subr.mxu0 0.0
        %v652 = vand.u32 %v266, 4294901760
        %653 = vmatpush1.msra.mxu0 %v652
        %654 = vmatprep.subr.mxu0 0.0
        %v655 = vand.u32 %v267, 4294901760
        %656 = vmatpush1.msra.mxu0 %v655
        %657 = vmatprep.subr.mxu0 0.0
        %v658 = vand.u32 %v268, 4294901760
        %659 = vmatpush1.msra.mxu0 %v658
        %660 = vmatprep.subr.mxu0 0.0
        %v661 = vand.u32 %v269, 4294901760
        %662 = vmatpush1.msra.mxu0 %v661
        %663 = vmatprep.subr.mxu0 0.0
        %v664 = vand.u32 %v270, 4294901760
        %665 = vmatpush1.msra.mxu0 %v664
        %666 = vmatprep.subr.mxu0 0.0
        %v667 = vand.u32 %v271, 4294901760
        %668 = vmatpush1.msra.mxu0 %v667
        %669 = vmatprep.subr.mxu0 0.0
        %v670 = vand.u32 %v272, 4294901760
        %671 = vmatpush1.msra.mxu0 %v670
        %672 = vmatprep.subr.mxu0 0.0
        %v673 = vand.u32 %v273, 4294901760
        %674 = vmatpush1.msra.mxu0 %v673
        %675 = vmatprep.subr.mxu0 0.0
        %v676 = vand.u32 %v274, 4294901760
        %677 = vmatpush1.msra.mxu0 %v676
        %678 = vmatprep.subr.mxu0 0.0
        %v679 = vand.u32 %v275, 4294901760
        %680 = vmatpush1.msra.mxu0 %v679
        %681 = vmatprep.subr.mxu0 0.0
        %v682 = vand.u32 %v276, 4294901760
        %683 = vmatpush1.msra.mxu0 %v682
        %684 = vmatprep.subr.mxu0 0.0
        %v685 = vand.u32 %v277, 4294901760
        %686 = vmatpush1.msra.mxu0 %v685
        %687 = vmatprep.subr.mxu0 0.0
        %v688 = vand.u32 %v278, 4294901760
        %689 = vmatpush1.msra.mxu0 %v688
        %690 = vmatprep.subr.mxu0 0.0
        %v691 = vand.u32 %v279, 4294901760
        %692 = vmatpush1.msra.mxu0 %v691
        %693 = vmatprep.subr.mxu0 0.0
        %v694 = vand.u32 %v280, 4294901760
        %695 = vmatpush1.msra.mxu0 %v694
        %696 = vmatprep.subr.mxu0 0.0
        %v697 = vand.u32 %v281, 4294901760
        %698 = vmatpush1.msra.mxu0 %v697
        %699 = vmatprep.subr.mxu0 0.0
        %700 = vmatpush1.msra.mxu0 0.0
        %701 = vmatprep.subr.mxu0 0.0
        %702 = vmatpush1.msra.mxu0 0.0
        %703 = vmatprep.subr.mxu0 0.0
        %704 = vmatpush1.msra.mxu0 0.0
        %705 = vmatprep.subr.mxu0 0.0
        %706 = vmatpush1.msra.mxu0 0.0
        %707 = vmatprep.subr.mxu0 0.0
        %708 = vmatpush1.msra.mxu0 0.0
        %709 = vmatprep.subr.mxu0 0.0
        %710 = vmatpush1.msra.mxu0 0.0
        %711 = vmatprep.subr.mxu0 0.0
        %712 = vmatpush1.msra.mxu0 0.0
        %713 = vmatprep.subr.mxu0 0.0
        %714 = vmatpush1.msra.mxu0 0.0
        %715 = vmatprep.subr.mxu0 0.0
        %716 = vmatpush1.msra.mxu0 0.0
        %717 = vmatprep.subr.mxu0 0.0
        %718 = vmatpush1.msra.mxu0 0.0
        %719 = vmatprep.subr.mxu0 0.0
        %720 = vmatpush1.msra.mxu0 0.0
        %721 = vmatprep.subr.mxu0 0.0
        %722 = vmatpush1.msra.mxu0 0.0
        %723 = vmatprep.subr.mxu0 0.0
        %724 = vmatpush1.msra.mxu0 0.0
        %725 = vmatprep.subr.mxu0 0.0
        %726 = vmatpush1.msra.mxu0 0.0
        %727 = vmatprep.subr.mxu0 0.0
        %728 = vmatpush1.msra.mxu0 0.0
        %729 = vmatprep.subr.mxu0 0.0
        %730 = vmatpush1.msra.mxu0 0.0
        %731 = vmatprep.mubr.f32.mxu0 0.0
        %v732 = vand.u32 %v264, 4294901760
        %v733 = vsub.f32 %v264, %v732
        %v734 = vand.u32 %v733, 4294901760
        %735 = vmatmul.mubr.f32.gmra.mrb[0].mxu0 %v734
        %v736 = vpop.f32.mrb[0].mxu0
        %v737 = vadd.f32 %v641, %v736
        %v738 = vpop.f32.mrb[0].mxu0
        %739 = vmatprep.mubr.f32.mxu0 0.0
        %v740 = vand.u32 %v265, 4294901760
        %v741 = vsub.f32 %v265, %v740
        %v742 = vand.u32 %v741, 4294901760
        %743 = vmatmul.mubr.f32.gmra.mrb[0].mxu0 %v742
        %v744 = vpop.f32.mrb[0].mxu0
        %v745 = vadd.f32 %v648, %v744
        %v746 = vpop.f32.mrb[0].mxu0
        %747 = vdwg.mxu0
        %748 = vmatprep.subr.mxu0 0.0
        %v749 = vand.u32 %v266, 4294901760
        %v750 = vsub.f32 %v266, %v749
        %v751 = vand.u32 %v750, 4294901760
        %752 = vmatpush1.msra.mxu0 %v751
        %753 = vmatprep.subr.mxu0 0.0
        %v754 = vand.u32 %v267, 4294901760
        %v755 = vsub.f32 %v267, %v754
        %v756 = vand.u32 %v755, 4294901760
        %757 = vmatpush1.msra.mxu0 %v756
        %758 = vmatprep.subr.mxu0 0.0
        %v759 = vand.u32 %v268, 4294901760
        %v760 = vsub.f32 %v268, %v759
        %v761 = vand.u32 %v760, 4294901760
        %762 = vmatpush1.msra.mxu0 %v761
        %763 = vmatprep.subr.mxu0 0.0
        %v764 = vand.u32 %v269, 4294901760
        %v765 = vsub.f32 %v269, %v764
        %v766 = vand.u32 %v765, 4294901760
        %767 = vmatpush1.msra.mxu0 %v766
        %768 = vmatprep.subr.mxu0 0.0
        %v769 = vand.u32 %v270, 4294901760
        %v770 = vsub.f32 %v270, %v769
        %v771 = vand.u32 %v770, 4294901760
        %772 = vmatpush1.msra.mxu0 %v771
        %773 = vmatprep.subr.mxu0 0.0
        %v774 = vand.u32 %v271, 4294901760
        %v775 = vsub.f32 %v271, %v774
        %v776 = vand.u32 %v775, 4294901760
        %777 = vmatpush1.msra.mxu0 %v776
        %778 = vmatprep.subr.mxu0 0.0
        %v779 = vand.u32 %v272, 4294901760
        %v780 = vsub.f32 %v272, %v779
        %v781 = vand.u32 %v780, 4294901760
        %782 = vmatpush1.msra.mxu0 %v781
        %783 = vmatprep.subr.mxu0 0.0
        %v784 = vand.u32 %v273, 4294901760
        %v785 = vsub.f32 %v273, %v784
        %v786 = vand.u32 %v785, 4294901760
        %787 = vmatpush1.msra.mxu0 %v786
        %788 = vmatprep.subr.mxu0 0.0
        %v789 = vand.u32 %v274, 4294901760
        %v790 = vsub.f32 %v274, %v789
        %v791 = vand.u32 %v790, 4294901760
        %792 = vmatpush1.msra.mxu0 %v791
        %793 = vmatprep.subr.mxu0 0.0
        %v794 = vand.u32 %v275, 4294901760
        %v795 = vsub.f32 %v275, %v794
        %v796 = vand.u32 %v795, 4294901760
        %797 = vmatpush1.msra.mxu0 %v796
        %798 = vmatprep.subr.mxu0 0.0
        %v799 = vand.u32 %v276, 4294901760
        %v800 = vsub.f32 %v276, %v799
        %v801 = vand.u32 %v800, 4294901760
        %802 = vmatpush1.msra.mxu0 %v801
        %803 = vmatprep.subr.mxu0 0.0
        %v804 = vand.u32 %v277, 4294901760
        %v805 = vsub.f32 %v277, %v804
        %v806 = vand.u32 %v805, 4294901760
        %807 = vmatpush1.msra.mxu0 %v806
        %808 = vmatprep.subr.mxu0 0.0
        %v809 = vand.u32 %v278, 4294901760
        %v810 = vsub.f32 %v278, %v809
        %v811 = vand.u32 %v810, 4294901760
        %812 = vmatpush1.msra.mxu0 %v811
        %813 = vmatprep.subr.mxu0 0.0
        %v814 = vand.u32 %v279, 4294901760
        %v815 = vsub.f32 %v279, %v814
        %v816 = vand.u32 %v815, 4294901760
        %817 = vmatpush1.msra.mxu0 %v816
        %818 = vmatprep.subr.mxu0 0.0
        %v819 = vand.u32 %v280, 4294901760
        %v820 = vsub.f32 %v280, %v819
        %v821 = vand.u32 %v820, 4294901760
        %822 = vmatpush1.msra.mxu0 %v821
        %823 = vmatprep.subr.mxu0 0.0
        %v824 = vand.u32 %v281, 4294901760
        %v825 = vsub.f32 %v281, %v824
        %v826 = vand.u32 %v825, 4294901760
        %827 = vmatpush1.msra.mxu0 %v826
        %828 = vmatprep.subr.mxu0 0.0
        %829 = vmatpush1.msra.mxu0 0.0
        %830 = vmatprep.subr.mxu0 0.0
        %831 = vmatpush1.msra.mxu0 0.0
        %832 = vmatprep.subr.mxu0 0.0
        %833 = vmatpush1.msra.mxu0 0.0
        %834 = vmatprep.subr.mxu0 0.0
        %835 = vmatpush1.msra.mxu0 0.0
        %836 = vmatprep.subr.mxu0 0.0
        %837 = vmatpush1.msra.mxu0 0.0
        %838 = vmatprep.subr.mxu0 0.0
        %839 = vmatpush1.msra.mxu0 0.0
        %840 = vmatprep.subr.mxu0 0.0
        %841 = vmatpush1.msra.mxu0 0.0
        %842 = vmatprep.subr.mxu0 0.0
        %843 = vmatpush1.msra.mxu0 0.0
        %844 = vmatprep.subr.mxu0 0.0
        %845 = vmatpush1.msra.mxu0 0.0
        %846 = vmatprep.subr.mxu0 0.0
        %847 = vmatpush1.msra.mxu0 0.0
        %848 = vmatprep.subr.mxu0 0.0
        %849 = vmatpush1.msra.mxu0 0.0
        %850 = vmatprep.subr.mxu0 0.0
        %851 = vmatpush1.msra.mxu0 0.0
        %852 = vmatprep.subr.mxu0 0.0
        %853 = vmatpush1.msra.mxu0 0.0
        %854 = vmatprep.subr.mxu0 0.0
        %855 = vmatpush1.msra.mxu0 0.0
        %856 = vmatprep.subr.mxu0 0.0
        %857 = vmatpush1.msra.mxu0 0.0
        %858 = vmatprep.subr.mxu0 0.0
        %859 = vmatpush1.msra.mxu0 0.0
        %860 = vmatprep.mubr.f32.mxu0 0.0
        %v861 = vand.u32 %v264, 4294901760
        %862 = vmatmul.mubr.f32.gmra.mrb[0].mxu0 %v861
        %v863 = vpop.f32.mrb[0].mxu0
        %v864 = vadd.f32 %v737, %v863
        %v865 = vpop.f32.mrb[0].mxu0
        %866 = vmatprep.mubr.f32.mxu0 0.0
        %v867 = vand.u32 %v265, 4294901760
        %868 = vmatmul.mubr.f32.gmra.mrb[0].mxu0 %v867
        %v869 = vpop.f32.mrb[0].mxu0
        %v870 = vadd.f32 %v745, %v869
        %v871 = vpop.f32.mrb[0].mxu0
        %872 = vdwg.mxu0
        %873 = vmatprep.subr.mxu0 0.0
        %v874 = vand.u32 %v266, 4294901760
        %875 = vmatpush1.msra.mxu0 %v874
        %876 = vmatprep.subr.mxu0 0.0
        %v877 = vand.u32 %v267, 4294901760
        %878 = vmatpush1.msra.mxu0 %v877
        %879 = vmatprep.subr.mxu0 0.0
        %v880 = vand.u32 %v268, 4294901760
        %881 = vmatpush1.msra.mxu0 %v880
        %882 = vmatprep.subr.mxu0 0.0
        %v883 = vand.u32 %v269, 4294901760
        %884 = vmatpush1.msra.mxu0 %v883
        %885 = vmatprep.subr.mxu0 0.0
        %v886 = vand.u32 %v270, 4294901760
        %887 = vmatpush1.msra.mxu0 %v886
        %888 = vmatprep.subr.mxu0 0.0
        %v889 = vand.u32 %v271, 4294901760
        %890 = vmatpush1.msra.mxu0 %v889
        %891 = vmatprep.subr.mxu0 0.0
        %v892 = vand.u32 %v272, 4294901760
        %893 = vmatpush1.msra.mxu0 %v892
        %894 = vmatprep.subr.mxu0 0.0
        %v895 = vand.u32 %v273, 4294901760
        %896 = vmatpush1.msra.mxu0 %v895
        %897 = vmatprep.subr.mxu0 0.0
        %v898 = vand.u32 %v274, 4294901760
        %899 = vmatpush1.msra.mxu0 %v898
        %900 = vmatprep.subr.mxu0 0.0
        %v901 = vand.u32 %v275, 4294901760
        %902 = vmatpush1.msra.mxu0 %v901
        %903 = vmatprep.subr.mxu0 0.0
        %v904 = vand.u32 %v276, 4294901760
        %905 = vmatpush1.msra.mxu0 %v904
        %906 = vmatprep.subr.mxu0 0.0
        %v907 = vand.u32 %v277, 4294901760
        %908 = vmatpush1.msra.mxu0 %v907
        %909 = vmatprep.subr.mxu0 0.0
        %v910 = vand.u32 %v278, 4294901760
        %911 = vmatpush1.msra.mxu0 %v910
        %912 = vmatprep.subr.mxu0 0.0
        %v913 = vand.u32 %v279, 4294901760
        %914 = vmatpush1.msra.mxu0 %v913
        %915 = vmatprep.subr.mxu0 0.0
        %v916 = vand.u32 %v280, 4294901760
        %917 = vmatpush1.msra.mxu0 %v916
        %918 = vmatprep.subr.mxu0 0.0
        %v919 = vand.u32 %v281, 4294901760
        %920 = vmatpush1.msra.mxu0 %v919
        %921 = vmatprep.subr.mxu0 0.0
        %922 = vmatpush1.msra.mxu0 0.0
        %923 = vmatprep.subr.mxu0 0.0
        %924 = vmatpush1.msra.mxu0 0.0
        %925 = vmatprep.subr.mxu0 0.0
        %926 = vmatpush1.msra.mxu0 0.0
        %927 = vmatprep.subr.mxu0 0.0
        %928 = vmatpush1.msra.mxu0 0.0
        %929 = vmatprep.subr.mxu0 0.0
        %930 = vmatpush1.msra.mxu0 0.0
        %931 = vmatprep.subr.mxu0 0.0
        %932 = vmatpush1.msra.mxu0 0.0
        %933 = vmatprep.subr.mxu0 0.0
        %934 = vmatpush1.msra.mxu0 0.0
        %935 = vmatprep.subr.mxu0 0.0
        %936 = vmatpush1.msra.mxu0 0.0
        %937 = vmatprep.subr.mxu0 0.0
        %938 = vmatpush1.msra.mxu0 0.0
        %939 = vmatprep.subr.mxu0 0.0
        %940 = vmatpush1.msra.mxu0 0.0
        %941 = vmatprep.subr.mxu0 0.0
        %942 = vmatpush1.msra.mxu0 0.0
        %943 = vmatprep.subr.mxu0 0.0
        %944 = vmatpush1.msra.mxu0 0.0
        %945 = vmatprep.subr.mxu0 0.0
        %946 = vmatpush1.msra.mxu0 0.0
        %947 = vmatprep.subr.mxu0 0.0
        %948 = vmatpush1.msra.mxu0 0.0
        %949 = vmatprep.subr.mxu0 0.0
        %950 = vmatpush1.msra.mxu0 0.0
        %951 = vmatprep.subr.mxu0 0.0
        %952 = vmatpush1.msra.mxu0 0.0
        %953 = vmatprep.mubr.f32.mxu0 0.0
        %v954 = vand.u32 %v264, 4294901760
        %955 = vmatmul.mubr.f32.gmra.mrb[0].mxu0 %v954
        %v956 = vpop.f32.mrb[0].mxu0
        %v957 = vadd.f32 %v864, %v956
        %v958 = vpop.f32.mrb[0].mxu0
        %959 = vmatprep.mubr.f32.mxu0 0.0
        %v960 = vand.u32 %v265, 4294901760
        %961 = vmatmul.mubr.f32.gmra.mrb[0].mxu0 %v960
        %v962 = vpop.f32.mrb[0].mxu0
        %v963 = vadd.f32 %v870, %v962
        %v964 = vpop.f32.mrb[0].mxu0
        %965 = vdwg.mxu0
        %v966 = vstv %s263
        %v967 = vmul.f32 %v957, %v966
        %v968 = vmul.f32 %v963, %v966
        %vm969 = vcmask 130048
        %v970 = vsel %vm969, %v967, -inf
        %971 = vmax.xlane.f32.xlu0 %v970
        %v972 = vpop.xlane.xlu0 %971
        %v973 = vsel %vm969, %v968, -inf
        %974 = vmax.xlane.f32.xlu0 %v973
        %v975 = vpop.xlane.xlu0 %974
        %v976 = vsub.f32 %v967, %v972
        %v977 = vsub.f32 %v968, %v975
        %v978 = vmul.f32 %v976, 1.442695
        %v979 = vpow.pop %v978
        %v980 = vmul.f32 %v977, 1.442695
        %v981 = vpow.pop %v980
        %v982 = vsel %vm969, %v979, 0.0
        %983 = vadd.xlane.f32.xlu0 %v982
        %v984 = vpop.xlane.xlu0 %983
        %v985 = vsel %vm969, %v981, 0.0
        %986 = vadd.xlane.f32.xlu0 %v985
        %v987 = vpop.xlane.xlu0 %986
        %v988 = vrcp.pop %v984
        %v989 = vmul.f32 %v979, %v988
        %v990 = vrcp.pop %v987
        %v991 = vmul.f32 %v981, %v990
        %v992 = vld [vmem:[%s259] sm:$0xff]
        %v993 = vld [vmem:[%s259 + $0x8] sm:$0xff]
        %v994 = vlaneseq
        %v995 = vand.u32 %v994, 127
        %996 = vset.pattern.permute.xlu0 0
        %997 = vperm.xlu0 %996, %v992
        %v998 = vpop.permute.xlu0 %997
        %999 = vset.pattern.permute.xlu0 0
        %1000 = vperm.xlu0 %999, %v993
        %v1001 = vpop.permute.xlu0 %1000
        %vm1002 = vcmp.eq.s32.totalorder %v995, %v998
        %vm1003 = vcmp.eq.s32.totalorder %v995, %v1001
        %v1004 = vsel %vm1002, 1, 0
        %v1005 = vsel %vm1003, 1, 0
        %v1006 = vcvt.s32.f32 %v1004
        %v1007 = vcvt.s32.f32 %v1005
        %v1008 = vsub.f32 %v1006, %v989
        %v1009 = vsub.f32 %v1007, %v991
        %v1010 = vstv %s262
        %v1011 = vmul.f32 %v1008, %v1010
        %v1012 = vmul.f32 %v1009, %v1010
        %v1013 = vld [vmem:[%s3] sm:$0xff]
        %v1014 = vld [vmem:[%s3 + $0x8] sm:$0xff]
        %v1016 = vsel %vm969, %v1011, 0
        %v1019 = vsel %vm969, %v1012, 0
        %1021 = vmatprep.subr.mxu0 0.0
        %v1022 = vand.u32 %v1013, 4294901760
        %1023 = vmatpush1.msra.mxu0 %v1022
        %1024 = vmatprep.subr.mxu0 0.0
        %v1025 = vand.u32 %v1014, 4294901760
        %1026 = vmatpush1.msra.mxu0 %v1025
        %1027 = vmatprep.subr.mxu0 0.0
        %1028 = vmatpush1.msra.mxu0 0.0
        %1029 = vmatprep.subr.mxu0 0.0
        %1030 = vmatpush1.msra.mxu0 0.0
        %1031 = vmatprep.subr.mxu0 0.0
        %1032 = vmatpush1.msra.mxu0 0.0
        %1033 = vmatprep.subr.mxu0 0.0
        %1034 = vmatpush1.msra.mxu0 0.0
        %1035 = vmatprep.subr.mxu0 0.0
        %1036 = vmatpush1.msra.mxu0 0.0
        %1037 = vmatprep.subr.mxu0 0.0
        %1038 = vmatpush1.msra.mxu0 0.0
        %1039 = vmatprep.subr.mxu0 0.0
        %1040 = vmatpush1.msra.mxu0 0.0
        %1041 = vmatprep.subr.mxu0 0.0
        %1042 = vmatpush1.msra.mxu0 0.0
        %1043 = vmatprep.subr.mxu0 0.0
        %1044 = vmatpush1.msra.mxu0 0.0
        %1045 = vmatprep.subr.mxu0 0.0
        %1046 = vmatpush1.msra.mxu0 0.0
        %1047 = vmatprep.subr.mxu0 0.0
        %1048 = vmatpush1.msra.mxu0 0.0
        %1049 = vmatprep.subr.mxu0 0.0
        %1050 = vmatpush1.msra.mxu0 0.0
        %1051 = vmatprep.subr.mxu0 0.0
        %1052 = vmatpush1.msra.mxu0 0.0
        %1053 = vmatprep.subr.mxu0 0.0
        %1054 = vmatpush1.msra.mxu0 0.0
        %1055 = vmatprep.subr.mxu0 0.0
        %1056 = vmatpush1.msra.mxu0 0.0
        %1057 = vmatprep.subr.mxu0 0.0
        %1058 = vmatpush1.msra.mxu0 0.0
        %1059 = vmatprep.subr.mxu0 0.0
        %1060 = vmatpush1.msra.mxu0 0.0
        %1061 = vmatprep.subr.mxu0 0.0
        %1062 = vmatpush1.msra.mxu0 0.0
        %1063 = vmatprep.subr.mxu0 0.0
        %1064 = vmatpush1.msra.mxu0 0.0
        %1065 = vmatprep.subr.mxu0 0.0
        %1066 = vmatpush1.msra.mxu0 0.0
        %1067 = vmatprep.subr.mxu0 0.0
        %1068 = vmatpush1.msra.mxu0 0.0
        %1069 = vmatprep.subr.mxu0 0.0
        %1070 = vmatpush1.msra.mxu0 0.0
        %1071 = vmatprep.subr.mxu0 0.0
        %1072 = vmatpush1.msra.mxu0 0.0
        %1073 = vmatprep.subr.mxu0 0.0
        %1074 = vmatpush1.msra.mxu0 0.0
        %1075 = vmatprep.subr.mxu0 0.0
        %1076 = vmatpush1.msra.mxu0 0.0
        %1077 = vmatprep.subr.mxu0 0.0
        %1078 = vmatpush1.msra.mxu0 0.0
        %1079 = vmatprep.subr.mxu0 0.0
        %1080 = vmatpush1.msra.mxu0 0.0
        %1081 = vmatprep.subr.mxu0 0.0
        %1082 = vmatpush1.msra.mxu0 0.0
        %1083 = vmatprep.subr.mxu0 0.0
        %1084 = vmatpush1.msra.mxu0 0.0
        %1085 = vmatprep.subr.mxu0 0.0
        %1086 = vmatpush1.msra.mxu0 0.0
        %1087 = vmatprep.mubr.f32.mxu0 0.0
        %v1088 = vand.u32 %v1016, 4294901760
        %v1089 = vsub.f32 %v1016, %v1088
        %v1090 = vand.u32 %v1089, 4294901760
        %v1091 = vsub.f32 %v1089, %v1090
        %v1092 = vand.u32 %v1091, 4294901760
        %1093 = vmatmul.mubr.f32.gmra.mrb[0].mxu0 %v1092
        %v1094 = vpop.f32.mrb[0].mxu0
        %v1095 = vadd.f32 0.0, %v1094
        %v1096 = vpop.f32.mrb[0].mxu0
        %1097 = vmatprep.mubr.f32.mxu0 0.0
        %v1098 = vand.u32 %v1019, 4294901760
        %v1099 = vsub.f32 %v1019, %v1098
        %v1100 = vand.u32 %v1099, 4294901760
        %v1101 = vsub.f32 %v1099, %v1100
        %v1102 = vand.u32 %v1101, 4294901760
        %1103 = vmatmul.mubr.f32.gmra.mrb[0].mxu0 %v1102
        %v1104 = vpop.f32.mrb[0].mxu0
        %v1105 = vadd.f32 0.0, %v1104
        %v1106 = vpop.f32.mrb[0].mxu0
        %1107 = vdwg.mxu0
        %1108 = vmatprep.subr.mxu0 0.0
        %v1109 = vand.u32 %v1013, 4294901760
        %v1110 = vsub.f32 %v1013, %v1109
        %v1111 = vand.u32 %v1110, 4294901760
        %v1112 = vsub.f32 %v1110, %v1111
        %v1113 = vand.u32 %v1112, 4294901760
        %1114 = vmatpush1.msra.mxu0 %v1113
        %1115 = vmatprep.subr.mxu0 0.0
        %v1116 = vand.u32 %v1014, 4294901760
        %v1117 = vsub.f32 %v1014, %v1116
        %v1118 = vand.u32 %v1117, 4294901760
        %v1119 = vsub.f32 %v1117, %v1118
        %v1120 = vand.u32 %v1119, 4294901760
        %1121 = vmatpush1.msra.mxu0 %v1120
        %1122 = vmatprep.subr.mxu0 0.0
        %1123 = vmatpush1.msra.mxu0 0.0
        %1124 = vmatprep.subr.mxu0 0.0
        %1125 = vmatpush1.msra.mxu0 0.0
        %1126 = vmatprep.subr.mxu0 0.0
        %1127 = vmatpush1.msra.mxu0 0.0
        %1128 = vmatprep.subr.mxu0 0.0
        %1129 = vmatpush1.msra.mxu0 0.0
        %1130 = vmatprep.subr.mxu0 0.0
        %1131 = vmatpush1.msra.mxu0 0.0
        %1132 = vmatprep.subr.mxu0 0.0
        %1133 = vmatpush1.msra.mxu0 0.0
        %1134 = vmatprep.subr.mxu0 0.0
        %1135 = vmatpush1.msra.mxu0 0.0
        %1136 = vmatprep.subr.mxu0 0.0
        %1137 = vmatpush1.msra.mxu0 0.0
        %1138 = vmatprep.subr.mxu0 0.0
        %1139 = vmatpush1.msra.mxu0 0.0
        %1140 = vmatprep.subr.mxu0 0.0
        %1141 = vmatpush1.msra.mxu0 0.0
        %1142 = vmatprep.subr.mxu0 0.0
        %1143 = vmatpush1.msra.mxu0 0.0
        %1144 = vmatprep.subr.mxu0 0.0
        %1145 = vmatpush1.msra.mxu0 0.0
        %1146 = vmatprep.subr.mxu0 0.0
        %1147 = vmatpush1.msra.mxu0 0.0
        %1148 = vmatprep.subr.mxu0 0.0
        %1149 = vmatpush1.msra.mxu0 0.0
        %1150 = vmatprep.subr.mxu0 0.0
        %1151 = vmatpush1.msra.mxu0 0.0
        %1152 = vmatprep.subr.mxu0 0.0
        %1153 = vmatpush1.msra.mxu0 0.0
        %1154 = vmatprep.subr.mxu0 0.0
        %1155 = vmatpush1.msra.mxu0 0.0
        %1156 = vmatprep.subr.mxu0 0.0
        %1157 = vmatpush1.msra.mxu0 0.0
        %1158 = vmatprep.subr.mxu0 0.0
        %1159 = vmatpush1.msra.mxu0 0.0
        %1160 = vmatprep.subr.mxu0 0.0
        %1161 = vmatpush1.msra.mxu0 0.0
        %1162 = vmatprep.subr.mxu0 0.0
        %1163 = vmatpush1.msra.mxu0 0.0
        %1164 = vmatprep.subr.mxu0 0.0
        %1165 = vmatpush1.msra.mxu0 0.0
        %1166 = vmatprep.subr.mxu0 0.0
        %1167 = vmatpush1.msra.mxu0 0.0
        %1168 = vmatprep.subr.mxu0 0.0
        %1169 = vmatpush1.msra.mxu0 0.0
        %1170 = vmatprep.subr.mxu0 0.0
        %1171 = vmatpush1.msra.mxu0 0.0
        %1172 = vmatprep.subr.mxu0 0.0
        %1173 = vmatpush1.msra.mxu0 0.0
        %1174 = vmatprep.subr.mxu0 0.0
        %1175 = vmatpush1.msra.mxu0 0.0
        %1176 = vmatprep.subr.mxu0 0.0
        %1177 = vmatpush1.msra.mxu0 0.0
        %1178 = vmatprep.subr.mxu0 0.0
        %1179 = vmatpush1.msra.mxu0 0.0
        %1180 = vmatprep.subr.mxu0 0.0
        %1181 = vmatpush1.msra.mxu0 0.0
        %1182 = vmatprep.mubr.f32.mxu0 0.0
        %v1183 = vand.u32 %v1016, 4294901760
        %1184 = vmatmul.mubr.f32.gmra.mrb[0].mxu0 %v1183
        %v1185 = vpop.f32.mrb[0].mxu0
        %v1186 = vadd.f32 %v1095, %v1185
        %v1187 = vpop.f32.mrb[0].mxu0
        %1188 = vmatprep.mubr.f32.mxu0 0.0
        %v1189 = vand.u32 %v1019, 4294901760
        %1190 = vmatmul.mubr.f32.gmra.mrb[0].mxu0 %v1189
        %v1191 = vpop.f32.mrb[0].mxu0
        %v1192 = vadd.f32 %v1105, %v1191
        %v1193 = vpop.f32.mrb[0].mxu0
        %1194 = vdwg.mxu0
        %1195 = vmatprep.subr.mxu0 0.0
        %v1196 = vand.u32 %v1013, 4294901760
        %v1197 = vsub.f32 %v1013, %v1196
        %1198 = vmatpush1.msra.mxu0 %v1197
        %1199 = vmatprep.subr.mxu0 0.0
        %v1200 = vand.u32 %v1014, 4294901760
        %v1201 = vsub.f32 %v1014, %v1200
        %1202 = vmatpush1.msra.mxu0 %v1201
        %1203 = vmatprep.subr.mxu0 0.0
        %1204 = vmatpush1.msra.mxu0 0.0
        %1205 = vmatprep.subr.mxu0 0.0
        %1206 = vmatpush1.msra.mxu0 0.0
        %1207 = vmatprep.subr.mxu0 0.0
        %1208 = vmatpush1.msra.mxu0 0.0
        %1209 = vmatprep.subr.mxu0 0.0
        %1210 = vmatpush1.msra.mxu0 0.0
        %1211 = vmatprep.subr.mxu0 0.0
        %1212 = vmatpush1.msra.mxu0 0.0
        %1213 = vmatprep.subr.mxu0 0.0
        %1214 = vmatpush1.msra.mxu0 0.0
        %1215 = vmatprep.subr.mxu0 0.0
        %1216 = vmatpush1.msra.mxu0 0.0
        %1217 = vmatprep.subr.mxu0 0.0
        %1218 = vmatpush1.msra.mxu0 0.0
        %1219 = vmatprep.subr.mxu0 0.0
        %1220 = vmatpush1.msra.mxu0 0.0
        %1221 = vmatprep.subr.mxu0 0.0
        %1222 = vmatpush1.msra.mxu0 0.0
        %1223 = vmatprep.subr.mxu0 0.0
        %1224 = vmatpush1.msra.mxu0 0.0
        %1225 = vmatprep.subr.mxu0 0.0
        %1226 = vmatpush1.msra.mxu0 0.0
        %1227 = vmatprep.subr.mxu0 0.0
        %1228 = vmatpush1.msra.mxu0 0.0
        %1229 = vmatprep.subr.mxu0 0.0
        %1230 = vmatpush1.msra.mxu0 0.0
        %1231 = vmatprep.subr.mxu0 0.0
        %1232 = vmatpush1.msra.mxu0 0.0
        %1233 = vmatprep.subr.mxu0 0.0
        %1234 = vmatpush1.msra.mxu0 0.0
        %1235 = vmatprep.subr.mxu0 0.0
        %1236 = vmatpush1.msra.mxu0 0.0
        %1237 = vmatprep.subr.mxu0 0.0
        %1238 = vmatpush1.msra.mxu0 0.0
        %1239 = vmatprep.subr.mxu0 0.0
        %1240 = vmatpush1.msra.mxu0 0.0
        %1241 = vmatprep.subr.mxu0 0.0
        %1242 = vmatpush1.msra.mxu0 0.0
        %1243 = vmatprep.subr.mxu0 0.0
        %1244 = vmatpush1.msra.mxu0 0.0
        %1245 = vmatprep.subr.mxu0 0.0
        %1246 = vmatpush1.msra.mxu0 0.0
        %1247 = vmatprep.subr.mxu0 0.0
        %1248 = vmatpush1.msra.mxu0 0.0
        %1249 = vmatprep.subr.mxu0 0.0
        %1250 = vmatpush1.msra.mxu0 0.0
        %1251 = vmatprep.subr.mxu0 0.0
        %1252 = vmatpush1.msra.mxu0 0.0
        %1253 = vmatprep.subr.mxu0 0.0
        %1254 = vmatpush1.msra.mxu0 0.0
        %1255 = vmatprep.subr.mxu0 0.0
        %1256 = vmatpush1.msra.mxu0 0.0
        %1257 = vmatprep.subr.mxu0 0.0
        %1258 = vmatpush1.msra.mxu0 0.0
        %1259 = vmatprep.subr.mxu0 0.0
        %1260 = vmatpush1.msra.mxu0 0.0
        %1261 = vmatprep.subr.mxu0 0.0
        %1262 = vmatpush1.msra.mxu0 0.0
        %1263 = vmatprep.mubr.f32.mxu0 0.0
        %v1264 = vand.u32 %v1016, 4294901760
        %v1265 = vsub.f32 %v1016, %v1264
        %1266 = vmatmul.mubr.f32.gmra.mrb[0].mxu0 %v1265
        %v1267 = vpop.f32.mrb[0].mxu0
        %v1268 = vadd.f32 %v1186, %v1267
        %v1269 = vpop.f32.mrb[0].mxu0
        %1270 = vmatprep.mubr.f32.mxu0 0.0
        %v1271 = vand.u32 %v1019, 4294901760
        %v1272 = vsub.f32 %v1019, %v1271
        %1273 = vmatmul.mubr.f32.gmra.mrb[0].mxu0 %v1272
        %v1274 = vpop.f32.mrb[0].mxu0
        %v1275 = vadd.f32 %v1192, %v1274
        %v1276 = vpop.f32.mrb[0].mxu0
        %1277 = vdwg.mxu0
        %1278 = vmatprep.subr.mxu0 0.0
        %v1279 = vand.u32 %v1013, 4294901760
        %1280 = vmatpush1.msra.mxu0 %v1279
        %1281 = vmatprep.subr.mxu0 0.0
        %v1282 = vand.u32 %v1014, 4294901760
        %1283 = vmatpush1.msra.mxu0 %v1282
        %1284 = vmatprep.subr.mxu0 0.0
        %1285 = vmatpush1.msra.mxu0 0.0
        %1286 = vmatprep.subr.mxu0 0.0
        %1287 = vmatpush1.msra.mxu0 0.0
        %1288 = vmatprep.subr.mxu0 0.0
        %1289 = vmatpush1.msra.mxu0 0.0
        %1290 = vmatprep.subr.mxu0 0.0
        %1291 = vmatpush1.msra.mxu0 0.0
        %1292 = vmatprep.subr.mxu0 0.0
        %1293 = vmatpush1.msra.mxu0 0.0
        %1294 = vmatprep.subr.mxu0 0.0
        %1295 = vmatpush1.msra.mxu0 0.0
        %1296 = vmatprep.subr.mxu0 0.0
        %1297 = vmatpush1.msra.mxu0 0.0
        %1298 = vmatprep.subr.mxu0 0.0
        %1299 = vmatpush1.msra.mxu0 0.0
        %1300 = vmatprep.subr.mxu0 0.0
        %1301 = vmatpush1.msra.mxu0 0.0
        %1302 = vmatprep.subr.mxu0 0.0
        %1303 = vmatpush1.msra.mxu0 0.0
        %1304 = vmatprep.subr.mxu0 0.0
        %1305 = vmatpush1.msra.mxu0 0.0
        %1306 = vmatprep.subr.mxu0 0.0
        %1307 = vmatpush1.msra.mxu0 0.0
        %1308 = vmatprep.subr.mxu0 0.0
        %1309 = vmatpush1.msra.mxu0 0.0
        %1310 = vmatprep.subr.mxu0 0.0
        %1311 = vmatpush1.msra.mxu0 0.0
        %1312 = vmatprep.subr.mxu0 0.0
        %1313 = vmatpush1.msra.mxu0 0.0
        %1314 = vmatprep.subr.mxu0 0.0
        %1315 = vmatpush1.msra.mxu0 0.0
        %1316 = vmatprep.subr.mxu0 0.0
        %1317 = vmatpush1.msra.mxu0 0.0
        %1318 = vmatprep.subr.mxu0 0.0
        %1319 = vmatpush1.msra.mxu0 0.0
        %1320 = vmatprep.subr.mxu0 0.0
        %1321 = vmatpush1.msra.mxu0 0.0
        %1322 = vmatprep.subr.mxu0 0.0
        %1323 = vmatpush1.msra.mxu0 0.0
        %1324 = vmatprep.subr.mxu0 0.0
        %1325 = vmatpush1.msra.mxu0 0.0
        %1326 = vmatprep.subr.mxu0 0.0
        %1327 = vmatpush1.msra.mxu0 0.0
        %1328 = vmatprep.subr.mxu0 0.0
        %1329 = vmatpush1.msra.mxu0 0.0
        %1330 = vmatprep.subr.mxu0 0.0
        %1331 = vmatpush1.msra.mxu0 0.0
        %1332 = vmatprep.subr.mxu0 0.0
        %1333 = vmatpush1.msra.mxu0 0.0
        %1334 = vmatprep.subr.mxu0 0.0
        %1335 = vmatpush1.msra.mxu0 0.0
        %1336 = vmatprep.subr.mxu0 0.0
        %1337 = vmatpush1.msra.mxu0 0.0
        %1338 = vmatprep.subr.mxu0 0.0
        %1339 = vmatpush1.msra.mxu0 0.0
        %1340 = vmatprep.subr.mxu0 0.0
        %1341 = vmatpush1.msra.mxu0 0.0
        %1342 = vmatprep.subr.mxu0 0.0
        %1343 = vmatpush1.msra.mxu0 0.0
        %1344 = vmatprep.mubr.f32.mxu0 0.0
        %v1345 = vand.u32 %v1016, 4294901760
        %v1346 = vsub.f32 %v1016, %v1345
        %v1347 = vand.u32 %v1346, 4294901760
        %1348 = vmatmul.mubr.f32.gmra.mrb[0].mxu0 %v1347
        %v1349 = vpop.f32.mrb[0].mxu0
        %v1350 = vadd.f32 %v1268, %v1349
        %v1351 = vpop.f32.mrb[0].mxu0
        %1352 = vmatprep.mubr.f32.mxu0 0.0
        %v1353 = vand.u32 %v1019, 4294901760
        %v1354 = vsub.f32 %v1019, %v1353
        %v1355 = vand.u32 %v1354, 4294901760
        %1356 = vmatmul.mubr.f32.gmra.mrb[0].mxu0 %v1355
        %v1357 = vpop.f32.mrb[0].mxu0
        %v1358 = vadd.f32 %v1275, %v1357
        %v1359 = vpop.f32.mrb[0].mxu0
        %1360 = vdwg.mxu0
        %1361 = vmatprep.subr.mxu0 0.0
        %v1362 = vand.u32 %v1013, 4294901760
        %v1363 = vsub.f32 %v1013, %v1362
        %v1364 = vand.u32 %v1363, 4294901760
        %1365 = vmatpush1.msra.mxu0 %v1364
        %1366 = vmatprep.subr.mxu0 0.0
        %v1367 = vand.u32 %v1014, 4294901760
        %v1368 = vsub.f32 %v1014, %v1367
        %v1369 = vand.u32 %v1368, 4294901760
        %1370 = vmatpush1.msra.mxu0 %v1369
        %1371 = vmatprep.subr.mxu0 0.0
        %1372 = vmatpush1.msra.mxu0 0.0
        %1373 = vmatprep.subr.mxu0 0.0
        %1374 = vmatpush1.msra.mxu0 0.0
        %1375 = vmatprep.subr.mxu0 0.0
        %1376 = vmatpush1.msra.mxu0 0.0
        %1377 = vmatprep.subr.mxu0 0.0
        %1378 = vmatpush1.msra.mxu0 0.0
        %1379 = vmatprep.subr.mxu0 0.0
        %1380 = vmatpush1.msra.mxu0 0.0
        %1381 = vmatprep.subr.mxu0 0.0
        %1382 = vmatpush1.msra.mxu0 0.0
        %1383 = vmatprep.subr.mxu0 0.0
        %1384 = vmatpush1.msra.mxu0 0.0
        %1385 = vmatprep.subr.mxu0 0.0
        %1386 = vmatpush1.msra.mxu0 0.0
        %1387 = vmatprep.subr.mxu0 0.0
        %1388 = vmatpush1.msra.mxu0 0.0
        %1389 = vmatprep.subr.mxu0 0.0
        %1390 = vmatpush1.msra.mxu0 0.0
        %1391 = vmatprep.subr.mxu0 0.0
        %1392 = vmatpush1.msra.mxu0 0.0
        %1393 = vmatprep.subr.mxu0 0.0
        %1394 = vmatpush1.msra.mxu0 0.0
        %1395 = vmatprep.subr.mxu0 0.0
        %1396 = vmatpush1.msra.mxu0 0.0
        %1397 = vmatprep.subr.mxu0 0.0
        %1398 = vmatpush1.msra.mxu0 0.0
        %1399 = vmatprep.subr.mxu0 0.0
        %1400 = vmatpush1.msra.mxu0 0.0
        %1401 = vmatprep.subr.mxu0 0.0
        %1402 = vmatpush1.msra.mxu0 0.0
        %1403 = vmatprep.subr.mxu0 0.0
        %1404 = vmatpush1.msra.mxu0 0.0
        %1405 = vmatprep.subr.mxu0 0.0
        %1406 = vmatpush1.msra.mxu0 0.0
        %1407 = vmatprep.subr.mxu0 0.0
        %1408 = vmatpush1.msra.mxu0 0.0
        %1409 = vmatprep.subr.mxu0 0.0
        %1410 = vmatpush1.msra.mxu0 0.0
        %1411 = vmatprep.subr.mxu0 0.0
        %1412 = vmatpush1.msra.mxu0 0.0
        %1413 = vmatprep.subr.mxu0 0.0
        %1414 = vmatpush1.msra.mxu0 0.0
        %1415 = vmatprep.subr.mxu0 0.0
        %1416 = vmatpush1.msra.mxu0 0.0
        %1417 = vmatprep.subr.mxu0 0.0
        %1418 = vmatpush1.msra.mxu0 0.0
        %1419 = vmatprep.subr.mxu0 0.0
        %1420 = vmatpush1.msra.mxu0 0.0
        %1421 = vmatprep.subr.mxu0 0.0
        %1422 = vmatpush1.msra.mxu0 0.0
        %1423 = vmatprep.subr.mxu0 0.0
        %1424 = vmatpush1.msra.mxu0 0.0
        %1425 = vmatprep.subr.mxu0 0.0
        %1426 = vmatpush1.msra.mxu0 0.0
        %1427 = vmatprep.subr.mxu0 0.0
        %1428 = vmatpush1.msra.mxu0 0.0
        %1429 = vmatprep.subr.mxu0 0.0
        %1430 = vmatpush1.msra.mxu0 0.0
        %1431 = vmatprep.mubr.f32.mxu0 0.0
        %v1432 = vand.u32 %v1016, 4294901760
        %1433 = vmatmul.mubr.f32.gmra.mrb[0].mxu0 %v1432
        %v1434 = vpop.f32.mrb[0].mxu0
        %v1435 = vadd.f32 %v1350, %v1434
        %v1436 = vpop.f32.mrb[0].mxu0
        %1437 = vmatprep.mubr.f32.mxu0 0.0
        %v1438 = vand.u32 %v1019, 4294901760
        %1439 = vmatmul.mubr.f32.gmra.mrb[0].mxu0 %v1438
        %v1440 = vpop.f32.mrb[0].mxu0
        %v1441 = vadd.f32 %v1358, %v1440
        %v1442 = vpop.f32.mrb[0].mxu0
        %1443 = vdwg.mxu0
        %1444 = vmatprep.subr.mxu0 0.0
        %v1445 = vand.u32 %v1013, 4294901760
        %1446 = vmatpush1.msra.mxu0 %v1445
        %1447 = vmatprep.subr.mxu0 0.0
        %v1448 = vand.u32 %v1014, 4294901760
        %1449 = vmatpush1.msra.mxu0 %v1448
        %1450 = vmatprep.subr.mxu0 0.0
        %1451 = vmatpush1.msra.mxu0 0.0
        %1452 = vmatprep.subr.mxu0 0.0
        %1453 = vmatpush1.msra.mxu0 0.0
        %1454 = vmatprep.subr.mxu0 0.0
        %1455 = vmatpush1.msra.mxu0 0.0
        %1456 = vmatprep.subr.mxu0 0.0
        %1457 = vmatpush1.msra.mxu0 0.0
        %1458 = vmatprep.subr.mxu0 0.0
        %1459 = vmatpush1.msra.mxu0 0.0
        %1460 = vmatprep.subr.mxu0 0.0
        %1461 = vmatpush1.msra.mxu0 0.0
        %1462 = vmatprep.subr.mxu0 0.0
        %1463 = vmatpush1.msra.mxu0 0.0
        %1464 = vmatprep.subr.mxu0 0.0
        %1465 = vmatpush1.msra.mxu0 0.0
        %1466 = vmatprep.subr.mxu0 0.0
        %1467 = vmatpush1.msra.mxu0 0.0
        %1468 = vmatprep.subr.mxu0 0.0
        %1469 = vmatpush1.msra.mxu0 0.0
        %1470 = vmatprep.subr.mxu0 0.0
        %1471 = vmatpush1.msra.mxu0 0.0
        %1472 = vmatprep.subr.mxu0 0.0
        %1473 = vmatpush1.msra.mxu0 0.0
        %1474 = vmatprep.subr.mxu0 0.0
        %1475 = vmatpush1.msra.mxu0 0.0
        %1476 = vmatprep.subr.mxu0 0.0
        %1477 = vmatpush1.msra.mxu0 0.0
        %1478 = vmatprep.subr.mxu0 0.0
        %1479 = vmatpush1.msra.mxu0 0.0
        %1480 = vmatprep.subr.mxu0 0.0
        %1481 = vmatpush1.msra.mxu0 0.0
        %1482 = vmatprep.subr.mxu0 0.0
        %1483 = vmatpush1.msra.mxu0 0.0
        %1484 = vmatprep.subr.mxu0 0.0
        %1485 = vmatpush1.msra.mxu0 0.0
        %1486 = vmatprep.subr.mxu0 0.0
        %1487 = vmatpush1.msra.mxu0 0.0
        %1488 = vmatprep.subr.mxu0 0.0
        %1489 = vmatpush1.msra.mxu0 0.0
        %1490 = vmatprep.subr.mxu0 0.0
        %1491 = vmatpush1.msra.mxu0 0.0
        %1492 = vmatprep.subr.mxu0 0.0
        %1493 = vmatpush1.msra.mxu0 0.0
        %1494 = vmatprep.subr.mxu0 0.0
        %1495 = vmatpush1.msra.mxu0 0.0
        %1496 = vmatprep.subr.mxu0 0.0
        %1497 = vmatpush1.msra.mxu0 0.0
        %1498 = vmatprep.subr.mxu0 0.0
        %1499 = vmatpush1.msra.mxu0 0.0
        %1500 = vmatprep.subr.mxu0 0.0
        %1501 = vmatpush1.msra.mxu0 0.0
        %1502 = vmatprep.subr.mxu0 0.0
        %1503 = vmatpush1.msra.mxu0 0.0
        %1504 = vmatprep.subr.mxu0 0.0
        %1505 = vmatpush1.msra.mxu0 0.0
        %1506 = vmatprep.subr.mxu0 0.0
        %1507 = vmatpush1.msra.mxu0 0.0
        %1508 = vmatprep.subr.mxu0 0.0
        %1509 = vmatpush1.msra.mxu0 0.0
        %1510 = vmatprep.mubr.f32.mxu0 0.0
        %v1511 = vand.u32 %v1016, 4294901760
        %1512 = vmatmul.mubr.f32.gmra.mrb[0].mxu0 %v1511
        %v1513 = vpop.f32.mrb[0].mxu0
        %v1514 = vadd.f32 %v1435, %v1513
        %v1515 = vpop.f32.mrb[0].mxu0
        %1516 = vmatprep.mubr.f32.mxu0 0.0
        %v1517 = vand.u32 %v1019, 4294901760
        %1518 = vmatmul.mubr.f32.gmra.mrb[0].mxu0 %v1517
        %v1519 = vpop.f32.mrb[0].mxu0
        %v1520 = vadd.f32 %v1441, %v1519
        %v1521 = vpop.f32.mrb[0].mxu0
        %1522 = vdwg.mxu0
        %1523 = vst [vmem:[%s248] sm:$0xff] %v1514
        %1524 = vst [vmem:[%s248 + $0x8] sm:$0xff] %v1520
        %s1525 = sand.u32 %s143, 1
        %s1526 = scalar_lea.sflag [#allocation3], %s1525
        %s1527 = sand.u32 %s143, 1
        %s1528 = smul.addr %s1527, 16
        %s1529 = scalar_lea.vmem [#allocation5], %s1528
        // Predicated region
        $region45: #{tpu_custom_call.1} parent=39 // pred_check
          %p1530 = pneg %p153
        $region46: #{tpu_custom_call.1} parent=39 // pred_check_branch
          %1532 = sbr.rel (%p1530) target = $region48
        $region47: #{tpu_custom_call.1} parent=39 // pred_region
          %s1533 = smul.u32 2, %s20
          %s1535 = ssub.s32 256, 256
          %1536 = vsyncadd %s1526, %s1535
          %s1537 = smul.addr %s1533, 128
          %s1538 = scalar_lea.hbm %s5, %s1537
          %s1539 = sshll.u32 %s1529, 4
          %s1540 = int_to_ptr.vmem [resolvable:$true] %s1539
          %1545 = dma.vmem_to_hbm [thread:$0]  %s1540, 256, %s1538, %s1526, 128, 128, 8
        $region48: #{tpu_custom_call.1} parent=39 // pred_fallthru
          _
      $region40: #{tpu_custom_call.1} parent=5 // pred_fallthru
        _
      %p1546 = scmp.le.s32.totalorder 2, %s15
      // Predicated region
      $region49: #{tpu_custom_call.1} parent=5 // pred_check
        %p1547 = pneg %p1546
      $region50: #{tpu_custom_call.1} parent=5 // pred_check_branch
        %1549 = sbr.rel (%p1547) target = $region52
      $region51: #{tpu_custom_call.1} parent=5 // pred_region
        %s1550 = ssub.s32 %s15, 2
        // Predicated region
        $region53: #{tpu_custom_call.1} parent=51 // pred_check
          %p1551 = pneg %p159
        $region54: #{tpu_custom_call.1} parent=51 // pred_check_branch
          %1553 = sbr.rel (%p1551) target = $region56
        $region55: #{tpu_custom_call.1} parent=51 // pred_region
          %s1554 = sand.u32 %s144, 1
          %s1555 = scalar_lea.sflag [#allocation3], %s1554
          %s1556 = sand.u32 %s144, 1
          %s1557 = smul.addr %s1556, 16
          %s1558 = scalar_lea.vmem [#allocation5], %s1557
          %1559 = dma.done %s1555, 256
        $region56: #{tpu_custom_call.1} parent=51 // pred_fallthru
          _
      $region52: #{tpu_custom_call.1} parent=5 // pred_fallthru
        _
    $region6: #{tpu_custom_call.1} parent=1 // loop_footer
      %s19 = sadd.s32 1, %s15
    $region7: #{tpu_custom_call.1} parent=1 // loop_footer_branch
      %14 = sbr.rel target = $region3
    $region8: #{tpu_custom_call.1} parent=1 // loop_exit
      _
    %1560 = vsyncpa [#allocation3], 1
    %s1561 = scalar_lea.sflag [#allocation3], 1
    %1562 = vsyncpa %s1561, 1
    %1563 = vsyncpa [#allocation4], 1
    %s1564 = scalar_lea.sflag [#allocation4], 1
    %1565 = vsyncpa %s1564, 1

</llo_original>
